<compile_context>
chip_gen: v7x
topology: tpu7x:2x2x1
jax: 0.10.0
libtpu: 0.0.40
codegen_flags: <defaults>
</compile_context>

<pallas_src>
import jax
import jax.numpy as jnp
from jax.experimental import pallas as pl
from jax.experimental.pallas import tpu as pltpu


# ----------------------------- kernel body ---------------------------------

def autoencoder_kernel(x_ref, w1_ref, b1_ref, w2_ref, b2_ref, o_ref):
    # Encoder: (TB, D_pad) @ (D_pad, H_pad) on the MXU, f32 accumulation.
    h = jnp.dot(x_ref[...], w1_ref[...], preferred_element_type=jnp.float32)
    h = jnp.maximum(h + b1_ref[...], 0.0)            # +bias (broadcast) + ReLU (VPU)
    # Decoder: (TB, H_pad) @ (H_pad, D_pad) on the MXU.
    y = jnp.dot(h, w2_ref[...], preferred_element_type=jnp.float32)
    y = y + b2_ref[...]
    # Sigmoid via tanh: single EUP op, numerically robust for large |y|.
    o_ref[...] = (0.5 * jnp.tanh(0.5 * y) + 0.5).astype(o_ref.dtype)


# ----------------------------- host wrapper ---------------------------------

def _round_up(n, m):
    return ((n + m - 1) // m) * m


def _pad2(a, rows, cols):
    pr, pc = rows - a.shape[0], cols - a.shape[1]
    if pr == 0 and pc == 0:
        return a
    return jnp.pad(a, ((0, pr), (0, pc)))


def autoencoder_forward(x, w1, b1, w2, b2, *, block_b=256):
    """x: (B, input_size) f32; w1: (input_size, hidden); b1: (1, hidden);
       w2: (hidden, input_size); b2: (1, input_size). Returns (B, input_size)."""
    B, D = x.shape
    H = w1.shape[1]

    # Lane-dense padded dims (multiples of 128) and a sublane-aligned batch tile.
    D_pad = _round_up(D, 128)          # 300 -> 384
    H_pad = _round_up(H, 128)          # 20  -> 128
    TB = min(block_b, _round_up(B, 8)) # batch tile (multiple of 8)
    B_pad = _round_up(B, TB)

    # Zero-pad on the host; padded weight cols/rows and biases are zero so the
    # padded hidden lanes stay exactly 0 through ReLU and contribute nothing.
    xp = _pad2(x.astype(jnp.float32), B_pad, D_pad)
    w1p = _pad2(w1, D_pad, H_pad)
    b1p = _pad2(b1, 1, H_pad)
    w2p = _pad2(w2, H_pad, D_pad)
    b2p = _pad2(b2, 1, D_pad)

    grid = (B_pad // TB,)

    out_padded = pl.pallas_call(
        autoencoder_kernel,
        out_shape=jax.ShapeDtypeStruct((B_pad, D_pad), jnp.float32),
        grid=grid,
        in_specs=[
            # x: streamed one batch tile per grid step.
            pl.BlockSpec((TB, D_pad), lambda i: (i, 0)),
            # Weights / biases: constant block index -> fetched once, VMEM-resident.
            pl.BlockSpec((D_pad, H_pad), lambda i: (0, 0)),
            pl.BlockSpec((1, H_pad), lambda i: (0, 0)),
            pl.BlockSpec((H_pad, D_pad), lambda i: (0, 0)),
            pl.BlockSpec((1, D_pad), lambda i: (0, 0)),
        ],
        out_specs=pl.BlockSpec((TB, D_pad), lambda i: (i, 0)),
        compiler_params=pltpu.CompilerParams(
            # Batch tiles are independent: shard across TensorCores on v7x.
            dimension_semantics=("parallel",),
        ),
    )(xp, w1p, b1p, w2p, b2p)

    # Slice away batch padding and the padded feature columns (which hold
    # sigmoid(0)=0.5 from the zero-padded decoder bias region).
    return out_padded[:B, :D]


# ----------------------------- params / demo --------------------------------

def init_params(key, input_size=300, hidden_layer_size=20):
    """Deterministic init matching nn.Linear's U(-1/sqrt(fan_in), 1/sqrt(fan_in)).
    Weights stored as (in, out), i.e. transposed relative to PyTorch."""
    k1, k2, k3, k4 = jax.random.split(key, 4)
    bound1 = 1.0 / (input_size ** 0.5)
    bound2 = 1.0 / (hidden_layer_size ** 0.5)
    w1 = jax.random.uniform(k1, (input_size, hidden_layer_size),
                            jnp.float32, -bound1, bound1)
    b1 = jax.random.uniform(k2, (1, hidden_layer_size),
                            jnp.float32, -bound1, bound1)
    w2 = jax.random.uniform(k3, (hidden_layer_size, input_size),
                            jnp.float32, -bound2, bound2)
    b2 = jax.random.uniform(k4, (1, input_size),
                            jnp.float32, -bound2, bound2)
    return w1, b1, w2, b2


def _reference(x, w1, b1, w2, b2):
    h = jnp.maximum(x @ w1 + b1, 0.0)
    return jax.nn.sigmoid(h @ w2 + b2)


if __name__ == "__main__":
    key = jax.random.PRNGKey(0)
    kx, kp = jax.random.split(key)

    input_size = 300
    hidden = 20
    w1, b1, w2, b2 = init_params(kp, input_size, hidden)

    # Case 1: batch large enough to exercise the batch-tiled grid (2 tiles of 256).
    batch = 512
    x = jax.random.uniform(kx, (batch, input_size), jnp.float32)
    out = jax.block_until_ready(autoencoder_forward(x, w1, b1, w2, b2))
    ref = _reference(x, w1, b1, w2, b2)
    assert out.shape == (batch, input_size)
    assert jnp.allclose(out, ref, atol=1e-5, rtol=1e-5)

    # Case 2: tiny batch (module-default usage) -> padding/slicing path.
    x_small = x[:8]
    out_small = jax.block_until_ready(autoencoder_forward(x_small, w1, b1, w2, b2))
    ref_small = _reference(x_small, w1, b1, w2, b2)
    assert out_small.shape == (8, input_size)
    assert jnp.allclose(out_small, ref_small, atol=1e-5, rtol=1e-5)

    print("KERNEL_OK")
</pallas_src>

<mosaic_0001>
module attributes {stable_mosaic.version = 11 : i64} {
  func.func @autoencoder_kernel(%arg0: i32, %arg1: memref<256x384xf32, #tpu.memory_space<vmem>>, %arg2: memref<384x128xf32, #tpu.memory_space<vmem>>, %arg3: memref<1x128xf32, #tpu.memory_space<vmem>>, %arg4: memref<128x384xf32, #tpu.memory_space<vmem>>, %arg5: memref<1x384xf32, #tpu.memory_space<vmem>>, %arg6: memref<256x384xf32, #tpu.memory_space<vmem>>) attributes {dimension_semantics = [#tpu.dimension_semantics<parallel>], iteration_bounds = array<i64: 2>, scalar_prefetch = 0 : i64, scratch_operands = 0 : i64, tpu.core_type = #tpu.core_type<tc>, window_params = [{transform_indices = @transform_0, window_bounds = array<i64: 256, 384>}, {pipeline_mode = #tpu.pipeline_mode<synchronous>, transform_indices = @transform_1, window_bounds = array<i64: 384, 128>}, {pipeline_mode = #tpu.pipeline_mode<synchronous>, transform_indices = @transform_2, window_bounds = array<i64: 1, 128>}, {pipeline_mode = #tpu.pipeline_mode<synchronous>, transform_indices = @transform_3, window_bounds = array<i64: 128, 384>}, {pipeline_mode = #tpu.pipeline_mode<synchronous>, transform_indices = @transform_4, window_bounds = array<i64: 1, 384>}, {transform_indices = @transform_5, window_bounds = array<i64: 256, 384>}]} {
    %c0 = arith.constant 0 : index
    %c0_0 = arith.constant 0 : index
    %0 = vector.load %arg1[%c0, %c0_0] : memref<256x384xf32, #tpu.memory_space<vmem>>, vector<256x384xf32>
    %c0_1 = arith.constant 0 : index
    %c0_2 = arith.constant 0 : index
    %1 = vector.load %arg2[%c0_1, %c0_2] : memref<384x128xf32, #tpu.memory_space<vmem>>, vector<384x128xf32>
    %cst = arith.constant dense<0.000000e+00> : vector<256x128xf32>
    %2 = tpu.matmul %0, %1, %cst {dimension_numbers = #tpu.dot_dimension_numbers<[1], [0], [0], [1], [0, 0, 1, 1], [], []>} : vector<256x384xf32>, vector<384x128xf32>, vector<256x128xf32> -> vector<256x128xf32>
    %c0_3 = arith.constant 0 : index
    %c0_4 = arith.constant 0 : index
    %3 = vector.load %arg3[%c0_3, %c0_4] : memref<1x128xf32, #tpu.memory_space<vmem>>, vector<1x128xf32>
    %4 = vector.broadcast %3 : vector<1x128xf32> to vector<256x128xf32>
    %5 = arith.addf %2, %4 : vector<256x128xf32>
    %cst_5 = arith.constant 0.000000e+00 : f32
    %6 = vector.broadcast %cst_5 : f32 to vector<256x128xf32>
    %7 = arith.maximumf %5, %6 : vector<256x128xf32>
    %c0_6 = arith.constant 0 : index
    %c0_7 = arith.constant 0 : index
    %8 = vector.load %arg4[%c0_6, %c0_7] : memref<128x384xf32, #tpu.memory_space<vmem>>, vector<128x384xf32>
    %cst_8 = arith.constant dense<0.000000e+00> : vector<256x384xf32>
    %9 = tpu.matmul %7, %8, %cst_8 {dimension_numbers = #tpu.dot_dimension_numbers<[1], [0], [0], [1], [0, 0, 1, 1], [], []>} : vector<256x128xf32>, vector<128x384xf32>, vector<256x384xf32> -> vector<256x384xf32>
    %c0_9 = arith.constant 0 : index
    %c0_10 = arith.constant 0 : index
    %10 = vector.load %arg5[%c0_9, %c0_10] : memref<1x384xf32, #tpu.memory_space<vmem>>, vector<1x384xf32>
    %11 = vector.broadcast %10 : vector<1x384xf32> to vector<256x384xf32>
    %12 = arith.addf %9, %11 : vector<256x384xf32>
    %cst_11 = arith.constant 5.000000e-01 : f32
    %13 = vector.broadcast %cst_11 : f32 to vector<256x384xf32>
    %14 = arith.mulf %13, %12 : vector<256x384xf32>
    %15 = math.tanh %14 : vector<256x384xf32>
    %cst_12 = arith.constant 5.000000e-01 : f32
    %16 = vector.broadcast %cst_12 : f32 to vector<256x384xf32>
    %17 = arith.mulf %16, %15 : vector<256x384xf32>
    %cst_13 = arith.constant 5.000000e-01 : f32
    %18 = vector.broadcast %cst_13 : f32 to vector<256x384xf32>
    %19 = arith.addf %17, %18 : vector<256x384xf32>
    %c0_14 = arith.constant 0 : index
    %c0_15 = arith.constant 0 : index
    %20 = vector.load %arg6[%c0_14, %c0_15] : memref<256x384xf32, #tpu.memory_space<vmem>>, vector<256x384xf32>
    tpu.vector_store %arg6[%c0_14, %c0_15], %19 {strides = array<i32>} : memref<256x384xf32, #tpu.memory_space<vmem>>, vector<256x384xf32>,
    return
  }
  func.func @transform_0(%arg0: i32) -> (i32, i32) {
    %c0_i32 = arith.constant 0 : i32
    %c0_i32_0 = arith.constant 0 : i32
    return %arg0, %c0_i32 : i32, i32
  }
  func.func @transform_1(%arg0: i32) -> (i32, i32) {
    %c0_i32 = arith.constant 0 : i32
    %c0_i32_0 = arith.constant 0 : i32
    %c0_i32_1 = arith.constant 0 : i32
    return %c0_i32, %c0_i32_0 : i32, i32
  }
  func.func @transform_2(%arg0: i32) -> (i32, i32) {
    %c0_i32 = arith.constant 0 : i32
    %c0_i32_0 = arith.constant 0 : i32
    %c0_i32_1 = arith.constant 0 : i32
    return %c0_i32, %c0_i32_0 : i32, i32
  }
  func.func @transform_3(%arg0: i32) -> (i32, i32) {
    %c0_i32 = arith.constant 0 : i32
    %c0_i32_0 = arith.constant 0 : i32
    %c0_i32_1 = arith.constant 0 : i32
    return %c0_i32, %c0_i32_0 : i32, i32
  }
  func.func @transform_4(%arg0: i32) -> (i32, i32) {
    %c0_i32 = arith.constant 0 : i32
    %c0_i32_0 = arith.constant 0 : i32
    %c0_i32_1 = arith.constant 0 : i32
    return %c0_i32, %c0_i32_0 : i32, i32
  }
  func.func @transform_5(%arg0: i32) -> (i32, i32) {
    %c0_i32 = arith.constant 0 : i32
    %c0_i32_0 = arith.constant 0 : i32
    return %arg0, %c0_i32 : i32, i32
  }
}

</mosaic_0001>

<llo_original>
// kernel: tpu_custom_call.1
$region0: #{tpu_custom_call.1}
  #allocation0 [shape = 'u32[]', space=smem, size = 0x4, offset = 0x4, fixed_abs, tag = 'smem constant byte address 0x4 - core index']
  #allocation1 [shape = 'u32[144,128]{1,0:T(1,128)}', space=vmem, size = 0x12000, scoped, tag = 'internal scratch']
  %s0 = inlined_call_operand.hbm [shape: f32[512,384], index: 0, kind: input, shape index: {}]
  %s1 = inlined_call_operand.hbm [shape: f32[384,128], index: 1, kind: input, shape index: {}]
  %s2 = inlined_call_operand.vmem [shape: f32[1,128], index: 2, kind: input, shape index: {}]
  %s3 = inlined_call_operand.hbm [shape: f32[128,384], index: 3, kind: input, shape index: {}]
  %s4 = inlined_call_operand.vmem [shape: f32[1,384], index: 4, kind: input, shape index: {}]
  %s5 = inlined_call_operand.hbm [shape: f32[512,384], index: 5, kind: output, shape index: {}]
  %s6 = sld [smem:[#allocation0]]
  $region65: #{tpu_custom_call.1} parent=0
    _
  %s8 = ssub.s32 1, %s6
  %s9 = scalar_select 0, %s8, %s6
  $region1: #{tpu_custom_call.1} parent=0
    #allocation2 [shape = 'u8[786432]{0}', space=vmem, size = 0xc0000, scoped, tag = 'input window, operand 0']
    #allocation3 [shape = 's32[2]{0}', space=sflag, size = 0x8, scoped, tag = 'scoped memory for tpu_custom_call.1']
    #allocation4 [shape = 's32[2]{0}', space=sflag, size = 0x8, scoped, tag = 'scoped memory for tpu_custom_call.1']
    #allocation5 [shape = 'u8[196608]{0}', space=vmem, size = 0x30000, scoped, tag = 'input window, operand 1, single buffered']
    #allocation6 [shape = 's32[1]{0}', space=sflag, size = 0x4, scoped, tag = 'scoped memory for tpu_custom_call.1']
    #allocation7 [shape = 'u8[196608]{0}', space=vmem, size = 0x30000, scoped, tag = 'input window, operand 3, single buffered']
    #allocation8 [shape = 'u8[786432]{0}', space=vmem, size = 0xc0000, scoped, tag = 'output window, operand 0']
    %10 = vsyncpa [#allocation3], 0
    %s11 = scalar_lea.sflag [#allocation3], 1
    %12 = vsyncpa %s11, 0
    %13 = vsyncpa [#allocation6], 0
    %14 = vsyncpa [#allocation4], 0
    %s15 = scalar_lea.sflag [#allocation4], 1
    %16 = vsyncpa %s15, 0
    loop: start=0, step=1, limit=4
    $region2: #{tpu_custom_call.1} parent=1 // loop_pre_header
      _
    $region3: #{tpu_custom_call.1} parent=1 // loop_header
      %s18 = sphi 0, %s22
      %p19 = scmp.ge.s32.totalorder %s18, 4
      %s28 = sphi 0, %s30
      %s31 = sphi 0, %s28
      %s32 = sphi 0, %s31
      %s48 = sphi 0, %s32
      %s52 = sphi 0, %s52
      %s54 = sphi 0, %s52
      %s55 = sphi 0, %s54
      %s69 = sphi 0, %s55
      %s73 = sphi 0, %s73
      %s75 = sphi 0, %s73
      %s76 = sphi 0, %s75
      %s90 = sphi 0, %s76
      %s94 = sphi 0, %s94
      %s96 = sphi 0, %s94
      %s97 = sphi 0, %s96
      %s111 = sphi 0, %s97
      %s115 = sphi 0, %s115
      %s117 = sphi 0, %s115
      %s118 = sphi 0, %s117
      %s132 = sphi 0, %s118
      %s138 = sphi 0, %s140
      %s141 = sphi 0, %s138
      %s142 = sphi 0, %s141
      %s158 = sphi 0, %s142
    $region4: #{tpu_custom_call.1} parent=1 // loop_header_branch
      %21 = sbr.rel (%p19) target = $region8
    $region5: #{tpu_custom_call.1} parent=1 // loop_body
      %s23 = ssub.s32 %s18, 1
      %s24 = ssub.s32 %s18, 2
      %s25 = sadd.s32 %s18, 1
      %s26 = ssub.s32 %s18, %s25
      %p27 = scmp.eq.s32.totalorder %s26, 0
      %s29 = sadd.s32 %s28, 1
      %s30 = scalar_select %p27, %s28, %s29
      %p33 = pneg %p27
      %p34 = scmp.eq.s32.totalorder %s18, 1
      %p35 = por %p33, %p34
      %p36 = scmp.ne.s32.totalorder %s28, %s31
      %p37 = scmp.eq.s32.totalorder %s18, 0
      %p38 = por %p36, %p37
      %p39 = scmp.ne.s32.totalorder %s28, %s31
      %p40 = scmp.eq.s32.totalorder %s23, 1
      %p41 = por %p39, %p40
      %p42 = scmp.ne.s32.totalorder %s31, %s32
      %p43 = scmp.eq.s32.totalorder %s23, 0
      %p44 = por %p42, %p43
      %p45 = scmp.ne.s32.totalorder %s31, %s32
      %p46 = scmp.eq.s32.totalorder %s24, 1
      %p47 = por %p45, %p46
      %p49 = scmp.ne.s32.totalorder %s32, %s48
      %p50 = scmp.eq.s32.totalorder %s24, 0
      %p51 = por %p49, %p50
      %s53 = sadd.s32 %s52, 1
      %p56 = scmp.eq.s32.totalorder %s18, 1
      %p57 = scmp.ne.s32.totalorder %s52, %s54
      %p58 = scmp.eq.s32.totalorder %s18, 0
      %p59 = por %p57, %p58
      %p60 = scmp.ne.s32.totalorder %s52, %s54
      %p61 = scmp.eq.s32.totalorder %s23, 1
      %p62 = por %p60, %p61
      %p63 = scmp.ne.s32.totalorder %s54, %s55
      %p64 = scmp.eq.s32.totalorder %s23, 0
      %p65 = por %p63, %p64
      %p66 = scmp.ne.s32.totalorder %s54, %s55
      %p67 = scmp.eq.s32.totalorder %s24, 1
      %p68 = por %p66, %p67
      %p70 = scmp.ne.s32.totalorder %s55, %s69
      %p71 = scmp.eq.s32.totalorder %s24, 0
      %p72 = por %p70, %p71
      %s74 = sadd.s32 %s73, 1
      %p77 = scmp.eq.s32.totalorder %s18, 1
      %p78 = scmp.ne.s32.totalorder %s73, %s75
      %p79 = scmp.eq.s32.totalorder %s18, 0
      %p80 = por %p78, %p79
      %p81 = scmp.ne.s32.totalorder %s73, %s75
      %p82 = scmp.eq.s32.totalorder %s23, 1
      %p83 = por %p81, %p82
      %p84 = scmp.ne.s32.totalorder %s75, %s76
      %p85 = scmp.eq.s32.totalorder %s23, 0
      %p86 = por %p84, %p85
      %p87 = scmp.ne.s32.totalorder %s75, %s76
      %p88 = scmp.eq.s32.totalorder %s24, 1
      %p89 = por %p87, %p88
      %p91 = scmp.ne.s32.totalorder %s76, %s90
      %p92 = scmp.eq.s32.totalorder %s24, 0
      %p93 = por %p91, %p92
      %s95 = sadd.s32 %s94, 1
      %p98 = scmp.eq.s32.totalorder %s18, 1
      %p99 = scmp.ne.s32.totalorder %s94, %s96
      %p100 = scmp.eq.s32.totalorder %s18, 0
      %p101 = por %p99, %p100
      %p102 = scmp.ne.s32.totalorder %s94, %s96
      %p103 = scmp.eq.s32.totalorder %s23, 1
      %p104 = por %p102, %p103
      %p105 = scmp.ne.s32.totalorder %s96, %s97
      %p106 = scmp.eq.s32.totalorder %s23, 0
      %p107 = por %p105, %p106
      %p108 = scmp.ne.s32.totalorder %s96, %s97
      %p109 = scmp.eq.s32.totalorder %s24, 1
      %p110 = por %p108, %p109
      %p112 = scmp.ne.s32.totalorder %s97, %s111
      %p113 = scmp.eq.s32.totalorder %s24, 0
      %p114 = por %p112, %p113
      %s116 = sadd.s32 %s115, 1
      %p119 = scmp.eq.s32.totalorder %s18, 1
      %p120 = scmp.ne.s32.totalorder %s115, %s117
      %p121 = scmp.eq.s32.totalorder %s18, 0
      %p122 = por %p120, %p121
      %p123 = scmp.ne.s32.totalorder %s115, %s117
      %p124 = scmp.eq.s32.totalorder %s23, 1
      %p125 = por %p123, %p124
      %p126 = scmp.ne.s32.totalorder %s117, %s118
      %p127 = scmp.eq.s32.totalorder %s23, 0
      %p128 = por %p126, %p127
      %p129 = scmp.ne.s32.totalorder %s117, %s118
      %p130 = scmp.eq.s32.totalorder %s24, 1
      %p131 = por %p129, %p130
      %p133 = scmp.ne.s32.totalorder %s118, %s132
      %p134 = scmp.eq.s32.totalorder %s24, 0
      %p135 = por %p133, %p134
      %s136 = ssub.s32 %s18, %s25
      %p137 = scmp.eq.s32.totalorder %s136, 0
      %s139 = sadd.s32 %s138, 1
      %s140 = scalar_select %p137, %s138, %s139
      %p143 = pneg %p137
      %p144 = scmp.eq.s32.totalorder %s18, 1
      %p145 = por %p143, %p144
      %p146 = scmp.ne.s32.totalorder %s138, %s141
      %p147 = scmp.eq.s32.totalorder %s18, 0
      %p148 = por %p146, %p147
      %p149 = scmp.ne.s32.totalorder %s138, %s141
      %p150 = scmp.eq.s32.totalorder %s23, 1
      %p151 = por %p149, %p150
      %p152 = scmp.ne.s32.totalorder %s141, %s142
      %p153 = scmp.eq.s32.totalorder %s23, 0
      %p154 = por %p152, %p153
      %p155 = scmp.ne.s32.totalorder %s141, %s142
      %p156 = scmp.eq.s32.totalorder %s24, 1
      %p157 = por %p155, %p156
      %p159 = scmp.ne.s32.totalorder %s142, %s158
      %p160 = scmp.eq.s32.totalorder %s24, 0
      %p161 = por %p159, %p160
      %p162 = scmp.le.s32.totalorder 1, %s18
      %p163 = scmp.lt.s32.totalorder %s18, 3
      %p164 = pnand %p162, %p163
      %p165 = pneg %p164
      // Predicated region
      $region9: #{tpu_custom_call.1} parent=5 // pred_check
        _
      $region10: #{tpu_custom_call.1} parent=5 // pred_check_branch
        %167 = sbr.rel (%p164) target = $region12
      $region11: #{tpu_custom_call.1} parent=5 // pred_region
        %s168 = ssub.s32 %s18, 1
        // Predicated region
        $region13: #{tpu_custom_call.1} parent=11 // pred_check
          %p169 = pneg %p65
        $region14: #{tpu_custom_call.1} parent=11 // pred_check_branch
          %171 = sbr.rel (%p169) target = $region16
        $region15: #{tpu_custom_call.1} parent=11 // pred_region
          %s173 = ssub.s32 6144, 6144
          %174 = vsyncadd [#allocation6], %s173
          %s175 = sshll.u32 [#allocation5], 4
          %s176 = int_to_ptr.vmem [resolvable:$true] %s175
          %181 = dma.hbm_to_vmem [thread:$0]  %s1, 6144, %s176, [#allocation6], 128, 128, 8
        $region16: #{tpu_custom_call.1} parent=11 // pred_fallthru
          _
        // Predicated region
        $region17: #{tpu_custom_call.1} parent=11 // pred_check
          %p182 = pneg %p86
        $region18: #{tpu_custom_call.1} parent=11 // pred_check_branch
          %184 = sbr.rel (%p182) target = $region20
        $region19: #{tpu_custom_call.1} parent=11 // pred_region
          _
        $region20: #{tpu_custom_call.1} parent=11 // pred_fallthru
          _
        // Predicated region
        $region21: #{tpu_custom_call.1} parent=11 // pred_check
          %p185 = pneg %p107
        $region22: #{tpu_custom_call.1} parent=11 // pred_check_branch
          %187 = sbr.rel (%p185) target = $region24
        $region23: #{tpu_custom_call.1} parent=11 // pred_region
          %s189 = ssub.s32 6144, 6144
          %190 = vsyncadd [#allocation6], %s189
          %s191 = sshll.u32 [#allocation7], 4
          %s192 = int_to_ptr.vmem [resolvable:$true] %s191
          %197 = dma.hbm_to_vmem [thread:$0]  %s3, 6144, %s192, [#allocation6], 384, 384, 24
        $region24: #{tpu_custom_call.1} parent=11 // pred_fallthru
          _
        // Predicated region
        $region25: #{tpu_custom_call.1} parent=11 // pred_check
          %p198 = pneg %p128
        $region26: #{tpu_custom_call.1} parent=11 // pred_check_branch
          %200 = sbr.rel (%p198) target = $region28
        $region27: #{tpu_custom_call.1} parent=11 // pred_region
          _
        $region28: #{tpu_custom_call.1} parent=11 // pred_fallthru
          _
      $region12: #{tpu_custom_call.1} parent=5 // pred_fallthru
        _
      %p201 = scmp.lt.s32.totalorder %s18, 2
      // Predicated region
      $region29: #{tpu_custom_call.1} parent=5 // pred_check
        %p202 = pneg %p201
      $region30: #{tpu_custom_call.1} parent=5 // pred_check_branch
        %204 = sbr.rel (%p202) target = $region32
      $region31: #{tpu_custom_call.1} parent=5 // pred_region
        // Predicated region
        $region33: #{tpu_custom_call.1} parent=31 // pred_check
          %p205 = pneg %p38
        $region34: #{tpu_custom_call.1} parent=31 // pred_check_branch
          %207 = sbr.rel (%p205) target = $region36
        $region35: #{tpu_custom_call.1} parent=31 // pred_region
          %s208 = sand.u32 %s28, 1
          %s209 = scalar_lea.sflag [#allocation3], %s208
          %s210 = sand.u32 %s28, 1
          %s211 = smul.addr %s210, 768
          %s212 = scalar_lea.vmem [#allocation2], %s211
          %s213 = smul.u32 32, %s18
          %s215 = ssub.s32 12288, 12288
          %216 = vsyncadd %s209, %s215
          %s217 = smul.addr %s213, 3
          %s218 = smul.addr %s217, 128
          %s219 = scalar_lea.hbm %s0, %s218
          %s220 = sshll.u32 %s212, 4
          %s221 = int_to_ptr.vmem [resolvable:$true] %s220
          %226 = dma.hbm_to_vmem [thread:$0]  %s219, 12288, %s221, %s209, 384, 384, 24
        $region36: #{tpu_custom_call.1} parent=31 // pred_fallthru
          _
      $region32: #{tpu_custom_call.1} parent=5 // pred_fallthru
        _
      %p227 = scmp.le.s32.totalorder 1, %s18
      %p228 = scmp.lt.s32.totalorder %s18, 3
      %p229 = pnand %p227, %p228
      %p230 = pneg %p229
      // Predicated region
      $region37: #{tpu_custom_call.1} parent=5 // pred_check
        _
      $region38: #{tpu_custom_call.1} parent=5 // pred_check_branch
        %232 = sbr.rel (%p229) target = $region40
      $region39: #{tpu_custom_call.1} parent=5 // pred_region
        %s233 = ssub.s32 %s18, 1
        %s234 = sand.u32 %s31, 1
        %s235 = scalar_lea.sflag [#allocation3], %s234
        %s236 = sand.u32 %s31, 1
        %s237 = smul.addr %s236, 768
        %s238 = scalar_lea.vmem [#allocation2], %s237
        // Predicated region
        $region41: #{tpu_custom_call.1} parent=39 // pred_check
          %p239 = pneg %p44
        $region42: #{tpu_custom_call.1} parent=39 // pred_check_branch
          %241 = sbr.rel (%p239) target = $region44
        $region43: #{tpu_custom_call.1} parent=39 // pred_region
          %242 = dma.done %s235, 12288
        $region44: #{tpu_custom_call.1} parent=39 // pred_fallthru
          _
        // Predicated region
        $region45: #{tpu_custom_call.1} parent=39 // pred_check
          %p243 = pneg %p65
        $region46: #{tpu_custom_call.1} parent=39 // pred_check_branch
          %245 = sbr.rel (%p243) target = $region48
        $region47: #{tpu_custom_call.1} parent=39 // pred_region
          %246 = dma.done [#allocation6], 6144
        $region48: #{tpu_custom_call.1} parent=39 // pred_fallthru
          _
        // Predicated region
        $region49: #{tpu_custom_call.1} parent=39 // pred_check
          %p247 = pneg %p107
        $region50: #{tpu_custom_call.1} parent=39 // pred_check_branch
          %249 = sbr.rel (%p247) target = $region52
        $region51: #{tpu_custom_call.1} parent=39 // pred_region
          %250 = dma.done [#allocation6], 6144
        $region52: #{tpu_custom_call.1} parent=39 // pred_fallthru
          _
        %s251 = sand.u32 %s31, 1
        %s252 = scalar_lea.sflag [#allocation3], %s251
        %s253 = sand.u32 %s31, 1
        %s254 = smul.addr %s253, 768
        %s255 = scalar_lea.vmem [#allocation2], %s254
        %p256 = pneg %p44
        %p257 = pneg %p41
        %p258 = pneg %p65
        %p259 = pneg %p62
        %p260 = pneg %p86
        %p261 = pneg %p83
        %p262 = pneg %p107
        %p263 = pneg %p104
        %p264 = pneg %p128
        %p265 = pneg %p125
        %p266 = pneg %p154
        %p267 = pneg %p151
        %s268 = sand.u32 %s141, 1
        %s269 = scalar_lea.sflag [#allocation4], %s268
        %s270 = sand.u32 %s141, 1
        %s271 = smul.addr %s270, 768
        %s272 = scalar_lea.vmem [#allocation8], %s271
        %s273 = smul.u32 32, %s23
        %s274 = smul.u32 32, %s23
        %v275 = vld [vmem:[%s238] sm:$0xff]
        %v276 = vld [vmem:[%s238 + $0x8] sm:$0xff]
        %v277 = vld [vmem:[%s238 + $0x10] sm:$0xff]
        %v278 = vld [vmem:[%s238 + $0x18] sm:$0xff]
        %v279 = vld [vmem:[%s238 + $0x20] sm:$0xff]
        %v280 = vld [vmem:[%s238 + $0x28] sm:$0xff]
        %v281 = vld [vmem:[%s238 + $0x30] sm:$0xff]
        %v282 = vld [vmem:[%s238 + $0x38] sm:$0xff]
        %v283 = vld [vmem:[%s238 + $0x40] sm:$0xff]
        %v284 = vld [vmem:[%s238 + $0x48] sm:$0xff]
        %v285 = vld [vmem:[%s238 + $0x50] sm:$0xff]
        %v286 = vld [vmem:[%s238 + $0x58] sm:$0xff]
        %v287 = vld [vmem:[%s238 + $0x60] sm:$0xff]
        %v288 = vld [vmem:[%s238 + $0x68] sm:$0xff]
        %v289 = vld [vmem:[%s238 + $0x70] sm:$0xff]
        %v290 = vld [vmem:[%s238 + $0x78] sm:$0xff]
        %v291 = vld [vmem:[%s238 + $0x80] sm:$0xff]
        %v292 = vld [vmem:[%s238 + $0x88] sm:$0xff]
        %v293 = vld [vmem:[%s238 + $0x90] sm:$0xff]
        %v294 = vld [vmem:[%s238 + $0x98] sm:$0xff]
        %v295 = vld [vmem:[%s238 + $0xa0] sm:$0xff]
        %v296 = vld [vmem:[%s238 + $0xa8] sm:$0xff]
        %v297 = vld [vmem:[%s238 + $0xb0] sm:$0xff]
        %v298 = vld [vmem:[%s238 + $0xb8] sm:$0xff]
        %v299 = vld [vmem:[%s238 + $0xc0] sm:$0xff]
        %v300 = vld [vmem:[%s238 + $0xc8] sm:$0xff]
        %v301 = vld [vmem:[%s238 + $0xd0] sm:$0xff]
        %v302 = vld [vmem:[%s238 + $0xd8] sm:$0xff]
        %v303 = vld [vmem:[%s238 + $0xe0] sm:$0xff]
        %v304 = vld [vmem:[%s238 + $0xe8] sm:$0xff]
        %v305 = vld [vmem:[%s238 + $0xf0] sm:$0xff]
        %v306 = vld [vmem:[%s238 + $0xf8] sm:$0xff]
        %v307 = vld [vmem:[%s238 + $0x100] sm:$0xff]
        %v308 = vld [vmem:[%s238 + $0x108] sm:$0xff]
        %v309 = vld [vmem:[%s238 + $0x110] sm:$0xff]
        %v310 = vld [vmem:[%s238 + $0x118] sm:$0xff]
        %v311 = vld [vmem:[%s238 + $0x120] sm:$0xff]
        %v312 = vld [vmem:[%s238 + $0x128] sm:$0xff]
        %v313 = vld [vmem:[%s238 + $0x130] sm:$0xff]
        %v314 = vld [vmem:[%s238 + $0x138] sm:$0xff]
        %v315 = vld [vmem:[%s238 + $0x140] sm:$0xff]
        %v316 = vld [vmem:[%s238 + $0x148] sm:$0xff]
        %v317 = vld [vmem:[%s238 + $0x150] sm:$0xff]
        %v318 = vld [vmem:[%s238 + $0x158] sm:$0xff]
        %v319 = vld [vmem:[%s238 + $0x160] sm:$0xff]
        %v320 = vld [vmem:[%s238 + $0x168] sm:$0xff]
        %v321 = vld [vmem:[%s238 + $0x170] sm:$0xff]
        %v322 = vld [vmem:[%s238 + $0x178] sm:$0xff]
        %v323 = vld [vmem:[%s238 + $0x180] sm:$0xff]
        %v324 = vld [vmem:[%s238 + $0x188] sm:$0xff]
        %v325 = vld [vmem:[%s238 + $0x190] sm:$0xff]
        %v326 = vld [vmem:[%s238 + $0x198] sm:$0xff]
        %v327 = vld [vmem:[%s238 + $0x1a0] sm:$0xff]
        %v328 = vld [vmem:[%s238 + $0x1a8] sm:$0xff]
        %v329 = vld [vmem:[%s238 + $0x1b0] sm:$0xff]
        %v330 = vld [vmem:[%s238 + $0x1b8] sm:$0xff]
        %v331 = vld [vmem:[%s238 + $0x1c0] sm:$0xff]
        %v332 = vld [vmem:[%s238 + $0x1c8] sm:$0xff]
        %v333 = vld [vmem:[%s238 + $0x1d0] sm:$0xff]
        %v334 = vld [vmem:[%s238 + $0x1d8] sm:$0xff]
        %v335 = vld [vmem:[%s238 + $0x1e0] sm:$0xff]
        %v336 = vld [vmem:[%s238 + $0x1e8] sm:$0xff]
        %v337 = vld [vmem:[%s238 + $0x1f0] sm:$0xff]
        %v338 = vld [vmem:[%s238 + $0x1f8] sm:$0xff]
        %v339 = vld [vmem:[%s238 + $0x200] sm:$0xff]
        %v340 = vld [vmem:[%s238 + $0x208] sm:$0xff]
        %v341 = vld [vmem:[%s238 + $0x210] sm:$0xff]
        %v342 = vld [vmem:[%s238 + $0x218] sm:$0xff]
        %v343 = vld [vmem:[%s238 + $0x220] sm:$0xff]
        %v344 = vld [vmem:[%s238 + $0x228] sm:$0xff]
        %v345 = vld [vmem:[%s238 + $0x230] sm:$0xff]
        %v346 = vld [vmem:[%s238 + $0x238] sm:$0xff]
        %v347 = vld [vmem:[%s238 + $0x240] sm:$0xff]
        %v348 = vld [vmem:[%s238 + $0x248] sm:$0xff]
        %v349 = vld [vmem:[%s238 + $0x250] sm:$0xff]
        %v350 = vld [vmem:[%s238 + $0x258] sm:$0xff]
        %v351 = vld [vmem:[%s238 + $0x260] sm:$0xff]
        %v352 = vld [vmem:[%s238 + $0x268] sm:$0xff]
        %v353 = vld [vmem:[%s238 + $0x270] sm:$0xff]
        %v354 = vld [vmem:[%s238 + $0x278] sm:$0xff]
        %v355 = vld [vmem:[%s238 + $0x280] sm:$0xff]
        %v356 = vld [vmem:[%s238 + $0x288] sm:$0xff]
        %v357 = vld [vmem:[%s238 + $0x290] sm:$0xff]
        %v358 = vld [vmem:[%s238 + $0x298] sm:$0xff]
        %v359 = vld [vmem:[%s238 + $0x2a0] sm:$0xff]
        %v360 = vld [vmem:[%s238 + $0x2a8] sm:$0xff]
        %v361 = vld [vmem:[%s238 + $0x2b0] sm:$0xff]
        %v362 = vld [vmem:[%s238 + $0x2b8] sm:$0xff]
        %v363 = vld [vmem:[%s238 + $0x2c0] sm:$0xff]
        %v364 = vld [vmem:[%s238 + $0x2c8] sm:$0xff]
        %v365 = vld [vmem:[%s238 + $0x2d0] sm:$0xff]
        %v366 = vld [vmem:[%s238 + $0x2d8] sm:$0xff]
        %v367 = vld [vmem:[%s238 + $0x2e0] sm:$0xff]
        %v368 = vld [vmem:[%s238 + $0x2e8] sm:$0xff]
        %v369 = vld [vmem:[%s238 + $0x2f0] sm:$0xff]
        %v370 = vld [vmem:[%s238 + $0x2f8] sm:$0xff]
        %v371 = vld [vmem:[#allocation5] sm:$0xff]
        %v372 = vld [vmem:[#allocation5 + $0x8] sm:$0xff]
        %v373 = vld [vmem:[#allocation5 + $0x10] sm:$0xff]
        %v374 = vld [vmem:[#allocation5 + $0x18] sm:$0xff]
        %v375 = vld [vmem:[#allocation5 + $0x20] sm:$0xff]
        %v376 = vld [vmem:[#allocation5 + $0x28] sm:$0xff]
        %v377 = vld [vmem:[#allocation5 + $0x30] sm:$0xff]
        %v378 = vld [vmem:[#allocation5 + $0x38] sm:$0xff]
        %v379 = vld [vmem:[#allocation5 + $0x40] sm:$0xff]
        %v380 = vld [vmem:[#allocation5 + $0x48] sm:$0xff]
        %v381 = vld [vmem:[#allocation5 + $0x50] sm:$0xff]
        %v382 = vld [vmem:[#allocation5 + $0x58] sm:$0xff]
        %v383 = vld [vmem:[#allocation5 + $0x60] sm:$0xff]
        %v384 = vld [vmem:[#allocation5 + $0x68] sm:$0xff]
        %v385 = vld [vmem:[#allocation5 + $0x70] sm:$0xff]
        %v386 = vld [vmem:[#allocation5 + $0x78] sm:$0xff]
        %v387 = vld [vmem:[#allocation5 + $0x80] sm:$0xff]
        %v388 = vld [vmem:[#allocation5 + $0x88] sm:$0xff]
        %v389 = vld [vmem:[#allocation5 + $0x90] sm:$0xff]
        %v390 = vld [vmem:[#allocation5 + $0x98] sm:$0xff]
        %v391 = vld [vmem:[#allocation5 + $0xa0] sm:$0xff]
        %v392 = vld [vmem:[#allocation5 + $0xa8] sm:$0xff]
        %v393 = vld [vmem:[#allocation5 + $0xb0] sm:$0xff]
        %v394 = vld [vmem:[#allocation5 + $0xb8] sm:$0xff]
        %v395 = vld [vmem:[#allocation5 + $0xc0] sm:$0xff]
        %v396 = vld [vmem:[#allocation5 + $0xc8] sm:$0xff]
        %v397 = vld [vmem:[#allocation5 + $0xd0] sm:$0xff]
        %v398 = vld [vmem:[#allocation5 + $0xd8] sm:$0xff]
        %v399 = vld [vmem:[#allocation5 + $0xe0] sm:$0xff]
        %v400 = vld [vmem:[#allocation5 + $0xe8] sm:$0xff]
        %v401 = vld [vmem:[#allocation5 + $0xf0] sm:$0xff]
        %v402 = vld [vmem:[#allocation5 + $0xf8] sm:$0xff]
        %v403 = vld [vmem:[#allocation5 + $0x100] sm:$0xff]
        %v404 = vld [vmem:[#allocation5 + $0x108] sm:$0xff]
        %v405 = vld [vmem:[#allocation5 + $0x110] sm:$0xff]
        %v406 = vld [vmem:[#allocation5 + $0x118] sm:$0xff]
        %v407 = vld [vmem:[#allocation5 + $0x120] sm:$0xff]
        %v408 = vld [vmem:[#allocation5 + $0x128] sm:$0xff]
        %v409 = vld [vmem:[#allocation5 + $0x130] sm:$0xff]
        %v410 = vld [vmem:[#allocation5 + $0x138] sm:$0xff]
        %v411 = vld [vmem:[#allocation5 + $0x140] sm:$0xff]
        %v412 = vld [vmem:[#allocation5 + $0x148] sm:$0xff]
        %v413 = vld [vmem:[#allocation5 + $0x150] sm:$0xff]
        %v414 = vld [vmem:[#allocation5 + $0x158] sm:$0xff]
        %v415 = vld [vmem:[#allocation5 + $0x160] sm:$0xff]
        %v416 = vld [vmem:[#allocation5 + $0x168] sm:$0xff]
        %v417 = vld [vmem:[#allocation5 + $0x170] sm:$0xff]
        %v418 = vld [vmem:[#allocation5 + $0x178] sm:$0xff]
        %v419 = vld [vmem:[%s2] sm:$0x1]
        %v421 = vlaneseq
        %v422 = vshrl.u32 %v421, 7
        %v423 = vsub.s32 0, %v422
        %v424 = vrot.slane %v419, %v423
        %426 = vmatprep.subr.mxu0 0.0
        %427 = vmatpush1.msra.mxu0 %v371
        %428 = vmatprep.subr.mxu0 0.0
        %429 = vmatpush1.msra.mxu0 %v372
        %430 = vmatprep.subr.mxu0 0.0
        %431 = vmatpush1.msra.mxu0 %v373
        %432 = vmatprep.subr.mxu0 0.0
        %433 = vmatpush1.msra.mxu0 %v374
        %434 = vmatprep.subr.mxu0 0.0
        %435 = vmatpush1.msra.mxu0 %v375
        %436 = vmatprep.subr.mxu0 0.0
        %437 = vmatpush1.msra.mxu0 %v376
        %438 = vmatprep.subr.mxu0 0.0
        %439 = vmatpush1.msra.mxu0 %v377
        %440 = vmatprep.subr.mxu0 0.0
        %441 = vmatpush1.msra.mxu0 %v378
        %442 = vmatprep.subr.mxu0 0.0
        %443 = vmatpush1.msra.mxu0 %v379
        %444 = vmatprep.subr.mxu0 0.0
        %445 = vmatpush1.msra.mxu0 %v380
        %446 = vmatprep.subr.mxu0 0.0
        %447 = vmatpush1.msra.mxu0 %v381
        %448 = vmatprep.subr.mxu0 0.0
        %449 = vmatpush1.msra.mxu0 %v382
        %450 = vmatprep.subr.mxu0 0.0
        %451 = vmatpush1.msra.mxu0 %v383
        %452 = vmatprep.subr.mxu0 0.0
        %453 = vmatpush1.msra.mxu0 %v384
        %454 = vmatprep.subr.mxu0 0.0
        %455 = vmatpush1.msra.mxu0 %v385
        %456 = vmatprep.subr.mxu0 0.0
        %457 = vmatpush1.msra.mxu0 %v386
        %458 = vmatprep.subr.mxu0 0.0
        %459 = vmatpush1.msra.mxu0 %v387
        %460 = vmatprep.subr.mxu0 0.0
        %461 = vmatpush1.msra.mxu0 %v388
        %462 = vmatprep.subr.mxu0 0.0
        %463 = vmatpush1.msra.mxu0 %v389
        %464 = vmatprep.subr.mxu0 0.0
        %465 = vmatpush1.msra.mxu0 %v390
        %466 = vmatprep.subr.mxu0 0.0
        %467 = vmatpush1.msra.mxu0 %v391
        %468 = vmatprep.subr.mxu0 0.0
        %469 = vmatpush1.msra.mxu0 %v392
        %470 = vmatprep.subr.mxu0 0.0
        %471 = vmatpush1.msra.mxu0 %v393
        %472 = vmatprep.subr.mxu0 0.0
        %473 = vmatpush1.msra.mxu0 %v394
        %474 = vmatprep.subr.mxu0 0.0
        %475 = vmatpush1.msra.mxu0 %v395
        %476 = vmatprep.subr.mxu0 0.0
        %477 = vmatpush1.msra.mxu0 %v396
        %478 = vmatprep.subr.mxu0 0.0
        %479 = vmatpush1.msra.mxu0 %v397
        %480 = vmatprep.subr.mxu0 0.0
        %481 = vmatpush1.msra.mxu0 %v398
        %482 = vmatprep.subr.mxu0 0.0
        %483 = vmatpush1.msra.mxu0 %v399
        %484 = vmatprep.subr.mxu0 0.0
        %485 = vmatpush1.msra.mxu0 %v400
        %486 = vmatprep.subr.mxu0 0.0
        %487 = vmatpush1.msra.mxu0 %v401
        %488 = vmatprep.subr.mxu0 0.0
        %489 = vmatpush1.msra.mxu0 %v402
        %490 = vmatprep.mubr.f32.mxu0 %v276
        %491 = vmatmul.mubr.f32.gmra.mrb[0].mxu0 %v275
        %v492 = vpop.f32.mrb[0].mxu0
        %v493 = vadd.f32 %v424, %v492
        %v494 = vpop.f32.mrb[0].mxu0
        %495 = vmatprep.mubr.f32.mxu0 %v279
        %496 = vmatmul.mubr.f32.gmra.mrb[0].mxu0 %v278
        %v497 = vpop.f32.mrb[0].mxu0
        %v498 = vadd.f32 %v424, %v497
        %v499 = vpop.f32.mrb[0].mxu0
        %500 = vmatprep.mubr.f32.mxu0 %v282
        %501 = vmatmul.mubr.f32.gmra.mrb[0].mxu0 %v281
        %v502 = vpop.f32.mrb[0].mxu0
        %v503 = vadd.f32 %v424, %v502
        %v504 = vpop.f32.mrb[0].mxu0
        %505 = vmatprep.mubr.f32.mxu0 %v285
        %506 = vmatmul.mubr.f32.gmra.mrb[0].mxu0 %v284
        %v507 = vpop.f32.mrb[0].mxu0
        %v508 = vadd.f32 %v424, %v507
        %v509 = vpop.f32.mrb[0].mxu0
        %510 = vmatprep.mubr.f32.mxu0 %v288
        %511 = vmatmul.mubr.f32.gmra.mrb[0].mxu0 %v287
        %v512 = vpop.f32.mrb[0].mxu0
        %v513 = vadd.f32 %v424, %v512
        %v514 = vpop.f32.mrb[0].mxu0
        %515 = vmatprep.mubr.f32.mxu0 %v291
        %516 = vmatmul.mubr.f32.gmra.mrb[0].mxu0 %v290
        %v517 = vpop.f32.mrb[0].mxu0
        %v518 = vadd.f32 %v424, %v517
        %v519 = vpop.f32.mrb[0].mxu0
        %520 = vmatprep.mubr.f32.mxu0 %v294
        %521 = vmatmul.mubr.f32.gmra.mrb[0].mxu0 %v293
        %v522 = vpop.f32.mrb[0].mxu0
        %v523 = vadd.f32 %v424, %v522
        %v524 = vpop.f32.mrb[0].mxu0
        %525 = vmatprep.mubr.f32.mxu0 %v297
        %526 = vmatmul.mubr.f32.gmra.mrb[0].mxu0 %v296
        %v527 = vpop.f32.mrb[0].mxu0
        %v528 = vadd.f32 %v424, %v527
        %v529 = vpop.f32.mrb[0].mxu0
        %530 = vmatprep.mubr.f32.mxu0 %v300
        %531 = vmatmul.mubr.f32.gmra.mrb[0].mxu0 %v299
        %v532 = vpop.f32.mrb[0].mxu0
        %v533 = vadd.f32 %v424, %v532
        %v534 = vpop.f32.mrb[0].mxu0
        %535 = vmatprep.mubr.f32.mxu0 %v303
        %536 = vmatmul.mubr.f32.gmra.mrb[0].mxu0 %v302
        %v537 = vpop.f32.mrb[0].mxu0
        %v538 = vadd.f32 %v424, %v537
        %v539 = vpop.f32.mrb[0].mxu0
        %540 = vmatprep.mubr.f32.mxu0 %v306
        %541 = vmatmul.mubr.f32.gmra.mrb[0].mxu0 %v305
        %v542 = vpop.f32.mrb[0].mxu0
        %v543 = vadd.f32 %v424, %v542
        %v544 = vpop.f32.mrb[0].mxu0
        %545 = vmatprep.mubr.f32.mxu0 %v309
        %546 = vmatmul.mubr.f32.gmra.mrb[0].mxu0 %v308
        %v547 = vpop.f32.mrb[0].mxu0
        %v548 = vadd.f32 %v424, %v547
        %v549 = vpop.f32.mrb[0].mxu0
        %550 = vmatprep.mubr.f32.mxu0 %v312
        %551 = vmatmul.mubr.f32.gmra.mrb[0].mxu0 %v311
        %v552 = vpop.f32.mrb[0].mxu0
        %v553 = vadd.f32 %v424, %v552
        %v554 = vpop.f32.mrb[0].mxu0
        %555 = vmatprep.mubr.f32.mxu0 %v315
        %556 = vmatmul.mubr.f32.gmra.mrb[0].mxu0 %v314
        %v557 = vpop.f32.mrb[0].mxu0
        %v558 = vadd.f32 %v424, %v557
        %v559 = vpop.f32.mrb[0].mxu0
        %560 = vmatprep.mubr.f32.mxu0 %v318
        %561 = vmatmul.mubr.f32.gmra.mrb[0].mxu0 %v317
        %v562 = vpop.f32.mrb[0].mxu0
        %v563 = vadd.f32 %v424, %v562
        %v564 = vpop.f32.mrb[0].mxu0
        %565 = vmatprep.mubr.f32.mxu0 %v321
        %566 = vmatmul.mubr.f32.gmra.mrb[0].mxu0 %v320
        %v567 = vpop.f32.mrb[0].mxu0
        %v568 = vadd.f32 %v424, %v567
        %v569 = vpop.f32.mrb[0].mxu0
        %570 = vmatprep.mubr.f32.mxu0 %v324
        %571 = vmatmul.mubr.f32.gmra.mrb[0].mxu0 %v323
        %v572 = vpop.f32.mrb[0].mxu0
        %v573 = vadd.f32 %v424, %v572
        %v574 = vpop.f32.mrb[0].mxu0
        %575 = vmatprep.mubr.f32.mxu0 %v327
        %576 = vmatmul.mubr.f32.gmra.mrb[0].mxu0 %v326
        %v577 = vpop.f32.mrb[0].mxu0
        %v578 = vadd.f32 %v424, %v577
        %v579 = vpop.f32.mrb[0].mxu0
        %580 = vmatprep.mubr.f32.mxu0 %v330
        %581 = vmatmul.mubr.f32.gmra.mrb[0].mxu0 %v329
        %v582 = vpop.f32.mrb[0].mxu0
        %v583 = vadd.f32 %v424, %v582
        %v584 = vpop.f32.mrb[0].mxu0
        %585 = vmatprep.mubr.f32.mxu0 %v333
        %586 = vmatmul.mubr.f32.gmra.mrb[0].mxu0 %v332
        %v587 = vpop.f32.mrb[0].mxu0
        %v588 = vadd.f32 %v424, %v587
        %v589 = vpop.f32.mrb[0].mxu0
        %590 = vmatprep.mubr.f32.mxu0 %v336
        %591 = vmatmul.mubr.f32.gmra.mrb[0].mxu0 %v335
        %v592 = vpop.f32.mrb[0].mxu0
        %v593 = vadd.f32 %v424, %v592
        %v594 = vpop.f32.mrb[0].mxu0
        %595 = vmatprep.mubr.f32.mxu0 %v339
        %596 = vmatmul.mubr.f32.gmra.mrb[0].mxu0 %v338
        %v597 = vpop.f32.mrb[0].mxu0
        %v598 = vadd.f32 %v424, %v597
        %v599 = vpop.f32.mrb[0].mxu0
        %600 = vmatprep.mubr.f32.mxu0 %v342
        %601 = vmatmul.mubr.f32.gmra.mrb[0].mxu0 %v341
        %v602 = vpop.f32.mrb[0].mxu0
        %v603 = vadd.f32 %v424, %v602
        %v604 = vpop.f32.mrb[0].mxu0
        %605 = vmatprep.mubr.f32.mxu0 %v345
        %606 = vmatmul.mubr.f32.gmra.mrb[0].mxu0 %v344
        %v607 = vpop.f32.mrb[0].mxu0
        %v608 = vadd.f32 %v424, %v607
        %v609 = vpop.f32.mrb[0].mxu0
        %610 = vmatprep.mubr.f32.mxu0 %v348
        %611 = vmatmul.mubr.f32.gmra.mrb[0].mxu0 %v347
        %v612 = vpop.f32.mrb[0].mxu0
        %v613 = vadd.f32 %v424, %v612
        %v614 = vpop.f32.mrb[0].mxu0
        %615 = vmatprep.mubr.f32.mxu0 %v351
        %616 = vmatmul.mubr.f32.gmra.mrb[0].mxu0 %v350
        %v617 = vpop.f32.mrb[0].mxu0
        %v618 = vadd.f32 %v424, %v617
        %v619 = vpop.f32.mrb[0].mxu0
        %620 = vmatprep.mubr.f32.mxu0 %v354
        %621 = vmatmul.mubr.f32.gmra.mrb[0].mxu0 %v353
        %v622 = vpop.f32.mrb[0].mxu0
        %v623 = vadd.f32 %v424, %v622
        %v624 = vpop.f32.mrb[0].mxu0
        %625 = vmatprep.mubr.f32.mxu0 %v357
        %626 = vmatmul.mubr.f32.gmra.mrb[0].mxu0 %v356
        %v627 = vpop.f32.mrb[0].mxu0
        %v628 = vadd.f32 %v424, %v627
        %v629 = vpop.f32.mrb[0].mxu0
        %630 = vmatprep.mubr.f32.mxu0 %v360
        %631 = vmatmul.mubr.f32.gmra.mrb[0].mxu0 %v359
        %v632 = vpop.f32.mrb[0].mxu0
        %v633 = vadd.f32 %v424, %v632
        %v634 = vpop.f32.mrb[0].mxu0
        %635 = vmatprep.mubr.f32.mxu0 %v363
        %636 = vmatmul.mubr.f32.gmra.mrb[0].mxu0 %v362
        %v637 = vpop.f32.mrb[0].mxu0
        %v638 = vadd.f32 %v424, %v637
        %v639 = vpop.f32.mrb[0].mxu0
        %640 = vmatprep.mubr.f32.mxu0 %v366
        %641 = vmatmul.mubr.f32.gmra.mrb[0].mxu0 %v365
        %v642 = vpop.f32.mrb[0].mxu0
        %v643 = vadd.f32 %v424, %v642
        %v644 = vpop.f32.mrb[0].mxu0
        %645 = vmatprep.mubr.f32.mxu0 %v369
        %646 = vmatmul.mubr.f32.gmra.mrb[0].mxu0 %v368
        %v647 = vpop.f32.mrb[0].mxu0
        %v648 = vadd.f32 %v424, %v647
        %v649 = vpop.f32.mrb[0].mxu0
        %650 = vdwg.mxu0
        %651 = vmatprep.subr.mxu0 0.0
        %652 = vmatpush1.msra.mxu0 %v403
        %653 = vmatprep.subr.mxu0 0.0
        %654 = vmatpush1.msra.mxu0 %v404
        %655 = vmatprep.subr.mxu0 0.0
        %656 = vmatpush1.msra.mxu0 %v405
        %657 = vmatprep.subr.mxu0 0.0
        %658 = vmatpush1.msra.mxu0 %v406
        %659 = vmatprep.subr.mxu0 0.0
        %660 = vmatpush1.msra.mxu0 %v407
        %661 = vmatprep.subr.mxu0 0.0
        %662 = vmatpush1.msra.mxu0 %v408
        %663 = vmatprep.subr.mxu0 0.0
        %664 = vmatpush1.msra.mxu0 %v409
        %665 = vmatprep.subr.mxu0 0.0
        %666 = vmatpush1.msra.mxu0 %v410
        %667 = vmatprep.subr.mxu0 0.0
        %668 = vmatpush1.msra.mxu0 %v411
        %669 = vmatprep.subr.mxu0 0.0
        %670 = vmatpush1.msra.mxu0 %v412
        %671 = vmatprep.subr.mxu0 0.0
        %672 = vmatpush1.msra.mxu0 %v413
        %673 = vmatprep.subr.mxu0 0.0
        %674 = vmatpush1.msra.mxu0 %v414
        %675 = vmatprep.subr.mxu0 0.0
        %676 = vmatpush1.msra.mxu0 %v415
        %677 = vmatprep.subr.mxu0 0.0
        %678 = vmatpush1.msra.mxu0 %v416
        %679 = vmatprep.subr.mxu0 0.0
        %680 = vmatpush1.msra.mxu0 %v417
        %681 = vmatprep.subr.mxu0 0.0
        %682 = vmatpush1.msra.mxu0 %v418
        %683 = vmatprep.subr.mxu0 0.0
        %684 = vmatpush1.msra.mxu0 0.0
        %685 = vmatprep.subr.mxu0 0.0
        %686 = vmatpush1.msra.mxu0 0.0
        %687 = vmatprep.subr.mxu0 0.0
        %688 = vmatpush1.msra.mxu0 0.0
        %689 = vmatprep.subr.mxu0 0.0
        %690 = vmatpush1.msra.mxu0 0.0
        %691 = vmatprep.subr.mxu0 0.0
        %692 = vmatpush1.msra.mxu0 0.0
        %693 = vmatprep.subr.mxu0 0.0
        %694 = vmatpush1.msra.mxu0 0.0
        %695 = vmatprep.subr.mxu0 0.0
        %696 = vmatpush1.msra.mxu0 0.0
        %697 = vmatprep.subr.mxu0 0.0
        %698 = vmatpush1.msra.mxu0 0.0
        %699 = vmatprep.subr.mxu0 0.0
        %700 = vmatpush1.msra.mxu0 0.0
        %701 = vmatprep.subr.mxu0 0.0
        %702 = vmatpush1.msra.mxu0 0.0
        %703 = vmatprep.subr.mxu0 0.0
        %704 = vmatpush1.msra.mxu0 0.0
        %705 = vmatprep.subr.mxu0 0.0
        %706 = vmatpush1.msra.mxu0 0.0
        %707 = vmatprep.subr.mxu0 0.0
        %708 = vmatpush1.msra.mxu0 0.0
        %709 = vmatprep.subr.mxu0 0.0
        %710 = vmatpush1.msra.mxu0 0.0
        %711 = vmatprep.subr.mxu0 0.0
        %712 = vmatpush1.msra.mxu0 0.0
        %713 = vmatprep.subr.mxu0 0.0
        %714 = vmatpush1.msra.mxu0 0.0
        %715 = vmatprep.mubr.f32.mxu0 0.0
        %716 = vmatmul.mubr.f32.gmra.mrb[0].mxu0 %v277
        %v717 = vpop.f32.mrb[0].mxu0
        %v718 = vadd.f32 %v493, %v717
        %v719 = vpop.f32.mrb[0].mxu0
        %720 = vmatprep.mubr.f32.mxu0 0.0
        %721 = vmatmul.mubr.f32.gmra.mrb[0].mxu0 %v280
        %v722 = vpop.f32.mrb[0].mxu0
        %v723 = vadd.f32 %v498, %v722
        %v724 = vpop.f32.mrb[0].mxu0
        %725 = vmatprep.mubr.f32.mxu0 0.0
        %726 = vmatmul.mubr.f32.gmra.mrb[0].mxu0 %v283
        %v727 = vpop.f32.mrb[0].mxu0
        %v728 = vadd.f32 %v503, %v727
        %v729 = vpop.f32.mrb[0].mxu0
        %730 = vmatprep.mubr.f32.mxu0 0.0
        %731 = vmatmul.mubr.f32.gmra.mrb[0].mxu0 %v286
        %v732 = vpop.f32.mrb[0].mxu0
        %v733 = vadd.f32 %v508, %v732
        %v734 = vpop.f32.mrb[0].mxu0
        %735 = vmatprep.mubr.f32.mxu0 0.0
        %736 = vmatmul.mubr.f32.gmra.mrb[0].mxu0 %v289
        %v737 = vpop.f32.mrb[0].mxu0
        %v738 = vadd.f32 %v513, %v737
        %v739 = vpop.f32.mrb[0].mxu0
        %740 = vmatprep.mubr.f32.mxu0 0.0
        %741 = vmatmul.mubr.f32.gmra.mrb[0].mxu0 %v292
        %v742 = vpop.f32.mrb[0].mxu0
        %v743 = vadd.f32 %v518, %v742
        %v744 = vpop.f32.mrb[0].mxu0
        %745 = vmatprep.mubr.f32.mxu0 0.0
        %746 = vmatmul.mubr.f32.gmra.mrb[0].mxu0 %v295
        %v747 = vpop.f32.mrb[0].mxu0
        %v748 = vadd.f32 %v523, %v747
        %v749 = vpop.f32.mrb[0].mxu0
        %750 = vmatprep.mubr.f32.mxu0 0.0
        %751 = vmatmul.mubr.f32.gmra.mrb[0].mxu0 %v298
        %v752 = vpop.f32.mrb[0].mxu0
        %v753 = vadd.f32 %v528, %v752
        %v754 = vpop.f32.mrb[0].mxu0
        %755 = vmatprep.mubr.f32.mxu0 0.0
        %756 = vmatmul.mubr.f32.gmra.mrb[0].mxu0 %v301
        %v757 = vpop.f32.mrb[0].mxu0
        %v758 = vadd.f32 %v533, %v757
        %v759 = vpop.f32.mrb[0].mxu0
        %760 = vmatprep.mubr.f32.mxu0 0.0
        %761 = vmatmul.mubr.f32.gmra.mrb[0].mxu0 %v304
        %v762 = vpop.f32.mrb[0].mxu0
        %v763 = vadd.f32 %v538, %v762
        %v764 = vpop.f32.mrb[0].mxu0
        %765 = vmatprep.mubr.f32.mxu0 0.0
        %766 = vmatmul.mubr.f32.gmra.mrb[0].mxu0 %v307
        %v767 = vpop.f32.mrb[0].mxu0
        %v768 = vadd.f32 %v543, %v767
        %v769 = vpop.f32.mrb[0].mxu0
        %770 = vmatprep.mubr.f32.mxu0 0.0
        %771 = vmatmul.mubr.f32.gmra.mrb[0].mxu0 %v310
        %v772 = vpop.f32.mrb[0].mxu0
        %v773 = vadd.f32 %v548, %v772
        %v774 = vpop.f32.mrb[0].mxu0
        %775 = vmatprep.mubr.f32.mxu0 0.0
        %776 = vmatmul.mubr.f32.gmra.mrb[0].mxu0 %v313
        %v777 = vpop.f32.mrb[0].mxu0
        %v778 = vadd.f32 %v553, %v777
        %v779 = vpop.f32.mrb[0].mxu0
        %780 = vmatprep.mubr.f32.mxu0 0.0
        %781 = vmatmul.mubr.f32.gmra.mrb[0].mxu0 %v316
        %v782 = vpop.f32.mrb[0].mxu0
        %v783 = vadd.f32 %v558, %v782
        %v784 = vpop.f32.mrb[0].mxu0
        %785 = vmatprep.mubr.f32.mxu0 0.0
        %786 = vmatmul.mubr.f32.gmra.mrb[0].mxu0 %v319
        %v787 = vpop.f32.mrb[0].mxu0
        %v788 = vadd.f32 %v563, %v787
        %v789 = vpop.f32.mrb[0].mxu0
        %790 = vmatprep.mubr.f32.mxu0 0.0
        %791 = vmatmul.mubr.f32.gmra.mrb[0].mxu0 %v322
        %v792 = vpop.f32.mrb[0].mxu0
        %v793 = vadd.f32 %v568, %v792
        %v794 = vpop.f32.mrb[0].mxu0
        %795 = vmatprep.mubr.f32.mxu0 0.0
        %796 = vmatmul.mubr.f32.gmra.mrb[0].mxu0 %v325
        %v797 = vpop.f32.mrb[0].mxu0
        %v798 = vadd.f32 %v573, %v797
        %v799 = vpop.f32.mrb[0].mxu0
        %800 = vmatprep.mubr.f32.mxu0 0.0
        %801 = vmatmul.mubr.f32.gmra.mrb[0].mxu0 %v328
        %v802 = vpop.f32.mrb[0].mxu0
        %v803 = vadd.f32 %v578, %v802
        %v804 = vpop.f32.mrb[0].mxu0
        %805 = vmatprep.mubr.f32.mxu0 0.0
        %806 = vmatmul.mubr.f32.gmra.mrb[0].mxu0 %v331
        %v807 = vpop.f32.mrb[0].mxu0
        %v808 = vadd.f32 %v583, %v807
        %v809 = vpop.f32.mrb[0].mxu0
        %810 = vmatprep.mubr.f32.mxu0 0.0
        %811 = vmatmul.mubr.f32.gmra.mrb[0].mxu0 %v334
        %v812 = vpop.f32.mrb[0].mxu0
        %v813 = vadd.f32 %v588, %v812
        %v814 = vpop.f32.mrb[0].mxu0
        %815 = vmatprep.mubr.f32.mxu0 0.0
        %816 = vmatmul.mubr.f32.gmra.mrb[0].mxu0 %v337
        %v817 = vpop.f32.mrb[0].mxu0
        %v818 = vadd.f32 %v593, %v817
        %v819 = vpop.f32.mrb[0].mxu0
        %820 = vmatprep.mubr.f32.mxu0 0.0
        %821 = vmatmul.mubr.f32.gmra.mrb[0].mxu0 %v340
        %v822 = vpop.f32.mrb[0].mxu0
        %v823 = vadd.f32 %v598, %v822
        %v824 = vpop.f32.mrb[0].mxu0
        %825 = vmatprep.mubr.f32.mxu0 0.0
        %826 = vmatmul.mubr.f32.gmra.mrb[0].mxu0 %v343
        %v827 = vpop.f32.mrb[0].mxu0
        %v828 = vadd.f32 %v603, %v827
        %v829 = vpop.f32.mrb[0].mxu0
        %830 = vmatprep.mubr.f32.mxu0 0.0
        %831 = vmatmul.mubr.f32.gmra.mrb[0].mxu0 %v346
        %v832 = vpop.f32.mrb[0].mxu0
        %v833 = vadd.f32 %v608, %v832
        %v834 = vpop.f32.mrb[0].mxu0
        %835 = vmatprep.mubr.f32.mxu0 0.0
        %836 = vmatmul.mubr.f32.gmra.mrb[0].mxu0 %v349
        %v837 = vpop.f32.mrb[0].mxu0
        %v838 = vadd.f32 %v613, %v837
        %v839 = vpop.f32.mrb[0].mxu0
        %840 = vmatprep.mubr.f32.mxu0 0.0
        %841 = vmatmul.mubr.f32.gmra.mrb[0].mxu0 %v352
        %v842 = vpop.f32.mrb[0].mxu0
        %v843 = vadd.f32 %v618, %v842
        %v844 = vpop.f32.mrb[0].mxu0
        %845 = vmatprep.mubr.f32.mxu0 0.0
        %846 = vmatmul.mubr.f32.gmra.mrb[0].mxu0 %v355
        %v847 = vpop.f32.mrb[0].mxu0
        %v848 = vadd.f32 %v623, %v847
        %v849 = vpop.f32.mrb[0].mxu0
        %850 = vmatprep.mubr.f32.mxu0 0.0
        %851 = vmatmul.mubr.f32.gmra.mrb[0].mxu0 %v358
        %v852 = vpop.f32.mrb[0].mxu0
        %v853 = vadd.f32 %v628, %v852
        %v854 = vpop.f32.mrb[0].mxu0
        %855 = vmatprep.mubr.f32.mxu0 0.0
        %856 = vmatmul.mubr.f32.gmra.mrb[0].mxu0 %v361
        %v857 = vpop.f32.mrb[0].mxu0
        %v858 = vadd.f32 %v633, %v857
        %v859 = vpop.f32.mrb[0].mxu0
        %860 = vmatprep.mubr.f32.mxu0 0.0
        %861 = vmatmul.mubr.f32.gmra.mrb[0].mxu0 %v364
        %v862 = vpop.f32.mrb[0].mxu0
        %v863 = vadd.f32 %v638, %v862
        %v864 = vpop.f32.mrb[0].mxu0
        %865 = vmatprep.mubr.f32.mxu0 0.0
        %866 = vmatmul.mubr.f32.gmra.mrb[0].mxu0 %v367
        %v867 = vpop.f32.mrb[0].mxu0
        %v868 = vadd.f32 %v643, %v867
        %v869 = vpop.f32.mrb[0].mxu0
        %870 = vmatprep.mubr.f32.mxu0 0.0
        %871 = vmatmul.mubr.f32.gmra.mrb[0].mxu0 %v370
        %v872 = vpop.f32.mrb[0].mxu0
        %v873 = vadd.f32 %v648, %v872
        %v874 = vpop.f32.mrb[0].mxu0
        %875 = vdwg.mxu0
        %v876 = vmax.f32 %v718, 0.0
        %v877 = vmax.f32 %v723, 0.0
        %v878 = vmax.f32 %v728, 0.0
        %v879 = vmax.f32 %v733, 0.0
        %v880 = vmax.f32 %v738, 0.0
        %v881 = vmax.f32 %v743, 0.0
        %v882 = vmax.f32 %v748, 0.0
        %v883 = vmax.f32 %v753, 0.0
        %v884 = vmax.f32 %v758, 0.0
        %v885 = vmax.f32 %v763, 0.0
        %v886 = vmax.f32 %v768, 0.0
        %v887 = vmax.f32 %v773, 0.0
        %v888 = vmax.f32 %v778, 0.0
        %v889 = vmax.f32 %v783, 0.0
        %v890 = vmax.f32 %v788, 0.0
        %v891 = vmax.f32 %v793, 0.0
        %v892 = vmax.f32 %v798, 0.0
        %v893 = vmax.f32 %v803, 0.0
        %v894 = vmax.f32 %v808, 0.0
        %v895 = vmax.f32 %v813, 0.0
        %v896 = vmax.f32 %v818, 0.0
        %v897 = vmax.f32 %v823, 0.0
        %v898 = vmax.f32 %v828, 0.0
        %v899 = vmax.f32 %v833, 0.0
        %v900 = vmax.f32 %v838, 0.0
        %v901 = vmax.f32 %v843, 0.0
        %v902 = vmax.f32 %v848, 0.0
        %v903 = vmax.f32 %v853, 0.0
        %v904 = vmax.f32 %v858, 0.0
        %v905 = vmax.f32 %v863, 0.0
        %v906 = vmax.f32 %v868, 0.0
        %v907 = vmax.f32 %v873, 0.0
        %v908 = vld [vmem:[#allocation7] sm:$0xff]
        %v909 = vld [vmem:[#allocation7 + $0x8] sm:$0xff]
        %v910 = vld [vmem:[#allocation7 + $0x10] sm:$0xff]
        %v911 = vld [vmem:[#allocation7 + $0x18] sm:$0xff]
        %v912 = vld [vmem:[#allocation7 + $0x20] sm:$0xff]
        %v913 = vld [vmem:[#allocation7 + $0x28] sm:$0xff]
        %v914 = vld [vmem:[#allocation7 + $0x30] sm:$0xff]
        %v915 = vld [vmem:[#allocation7 + $0x38] sm:$0xff]
        %v916 = vld [vmem:[#allocation7 + $0x40] sm:$0xff]
        %v917 = vld [vmem:[#allocation7 + $0x48] sm:$0xff]
        %v918 = vld [vmem:[#allocation7 + $0x50] sm:$0xff]
        %v919 = vld [vmem:[#allocation7 + $0x58] sm:$0xff]
        %v920 = vld [vmem:[#allocation7 + $0x60] sm:$0xff]
        %v921 = vld [vmem:[#allocation7 + $0x68] sm:$0xff]
        %v922 = vld [vmem:[#allocation7 + $0x70] sm:$0xff]
        %v923 = vld [vmem:[#allocation7 + $0x78] sm:$0xff]
        %v924 = vld [vmem:[#allocation7 + $0x80] sm:$0xff]
        %v925 = vld [vmem:[#allocation7 + $0x88] sm:$0xff]
        %v926 = vld [vmem:[#allocation7 + $0x90] sm:$0xff]
        %v927 = vld [vmem:[#allocation7 + $0x98] sm:$0xff]
        %v928 = vld [vmem:[#allocation7 + $0xa0] sm:$0xff]
        %v929 = vld [vmem:[#allocation7 + $0xa8] sm:$0xff]
        %v930 = vld [vmem:[#allocation7 + $0xb0] sm:$0xff]
        %v931 = vld [vmem:[#allocation7 + $0xb8] sm:$0xff]
        %v932 = vld [vmem:[#allocation7 + $0xc0] sm:$0xff]
        %v933 = vld [vmem:[#allocation7 + $0xc8] sm:$0xff]
        %v934 = vld [vmem:[#allocation7 + $0xd0] sm:$0xff]
        %v935 = vld [vmem:[#allocation7 + $0xd8] sm:$0xff]
        %v936 = vld [vmem:[#allocation7 + $0xe0] sm:$0xff]
        %v937 = vld [vmem:[#allocation7 + $0xe8] sm:$0xff]
        %v938 = vld [vmem:[#allocation7 + $0xf0] sm:$0xff]
        %v939 = vld [vmem:[#allocation7 + $0xf8] sm:$0xff]
        %v940 = vld [vmem:[#allocation7 + $0x100] sm:$0xff]
        %v941 = vld [vmem:[#allocation7 + $0x108] sm:$0xff]
        %v942 = vld [vmem:[#allocation7 + $0x110] sm:$0xff]
        %v943 = vld [vmem:[#allocation7 + $0x118] sm:$0xff]
        %v944 = vld [vmem:[#allocation7 + $0x120] sm:$0xff]
        %v945 = vld [vmem:[#allocation7 + $0x128] sm:$0xff]
        %v946 = vld [vmem:[#allocation7 + $0x130] sm:$0xff]
        %v947 = vld [vmem:[#allocation7 + $0x138] sm:$0xff]
        %v948 = vld [vmem:[#allocation7 + $0x140] sm:$0xff]
        %v949 = vld [vmem:[#allocation7 + $0x148] sm:$0xff]
        %v950 = vld [vmem:[#allocation7 + $0x150] sm:$0xff]
        %v951 = vld [vmem:[#allocation7 + $0x158] sm:$0xff]
        %v952 = vld [vmem:[#allocation7 + $0x160] sm:$0xff]
        %v953 = vld [vmem:[#allocation7 + $0x168] sm:$0xff]
        %v954 = vld [vmem:[#allocation7 + $0x170] sm:$0xff]
        %v955 = vld [vmem:[#allocation7 + $0x178] sm:$0xff]
        %v956 = vld [vmem:[%s4] sm:$0x7]
        %v958 = vlaneseq
        %v959 = vshrl.u32 %v958, 7
        %v960 = vsub.s32 0, %v959
        %v961 = vrot.slane %v956, %v960
        %v962 = vlaneseq
        %v963 = vshrl.u32 %v962, 7
        %v964 = vsub.s32 1, %v963
        %v965 = vrot.slane %v956, %v964
        %v966 = vlaneseq
        %v967 = vshrl.u32 %v966, 7
        %v968 = vsub.s32 2, %v967
        %v969 = vrot.slane %v956, %v968
        %973 = vmatprep.subr.mxu0 %v909
        %974 = vmatpush1.msra.mxu0 %v908
        %975 = vmatprep.subr.mxu0 %v912
        %976 = vmatpush1.msra.mxu0 %v911
        %977 = vmatprep.subr.mxu0 %v915
        %978 = vmatpush1.msra.mxu0 %v914
        %979 = vmatprep.subr.mxu0 %v918
        %980 = vmatpush1.msra.mxu0 %v917
        %981 = vmatprep.subr.mxu0 %v921
        %982 = vmatpush1.msra.mxu0 %v920
        %983 = vmatprep.subr.mxu0 %v924
        %984 = vmatpush1.msra.mxu0 %v923
        %985 = vmatprep.subr.mxu0 %v927
        %986 = vmatpush1.msra.mxu0 %v926
        %987 = vmatprep.subr.mxu0 %v930
        %988 = vmatpush1.msra.mxu0 %v929
        %989 = vmatprep.subr.mxu0 %v933
        %990 = vmatpush1.msra.mxu0 %v932
        %991 = vmatprep.subr.mxu0 %v936
        %992 = vmatpush1.msra.mxu0 %v935
        %993 = vmatprep.subr.mxu0 %v939
        %994 = vmatpush1.msra.mxu0 %v938
        %995 = vmatprep.subr.mxu0 %v942
        %996 = vmatpush1.msra.mxu0 %v941
        %997 = vmatprep.subr.mxu0 %v945
        %998 = vmatpush1.msra.mxu0 %v944
        %999 = vmatprep.subr.mxu0 %v948
        %1000 = vmatpush1.msra.mxu0 %v947
        %1001 = vmatprep.subr.mxu0 %v951
        %1002 = vmatpush1.msra.mxu0 %v950
        %1003 = vmatprep.subr.mxu0 %v954
        %1004 = vmatpush1.msra.mxu0 %v953
        %1005 = vmatprep.subr.mxu0 0.0
        %1006 = vmatpush1.msra.mxu0 0.0
        %1007 = vmatprep.subr.mxu0 0.0
        %1008 = vmatpush1.msra.mxu0 0.0
        %1009 = vmatprep.subr.mxu0 0.0
        %1010 = vmatpush1.msra.mxu0 0.0
        %1011 = vmatprep.subr.mxu0 0.0
        %1012 = vmatpush1.msra.mxu0 0.0
        %1013 = vmatprep.subr.mxu0 0.0
        %1014 = vmatpush1.msra.mxu0 0.0
        %1015 = vmatprep.subr.mxu0 0.0
        %1016 = vmatpush1.msra.mxu0 0.0
        %1017 = vmatprep.subr.mxu0 0.0
        %1018 = vmatpush1.msra.mxu0 0.0
        %1019 = vmatprep.subr.mxu0 0.0
        %1020 = vmatpush1.msra.mxu0 0.0
        %1021 = vmatprep.subr.mxu0 0.0
        %1022 = vmatpush1.msra.mxu0 0.0
        %1023 = vmatprep.subr.mxu0 0.0
        %1024 = vmatpush1.msra.mxu0 0.0
        %1025 = vmatprep.subr.mxu0 0.0
        %1026 = vmatpush1.msra.mxu0 0.0
        %1027 = vmatprep.subr.mxu0 0.0
        %1028 = vmatpush1.msra.mxu0 0.0
        %1029 = vmatprep.subr.mxu0 0.0
        %1030 = vmatpush1.msra.mxu0 0.0
        %1031 = vmatprep.subr.mxu0 0.0
        %1032 = vmatpush1.msra.mxu0 0.0
        %1033 = vmatprep.subr.mxu0 0.0
        %1034 = vmatpush1.msra.mxu0 0.0
        %1035 = vmatprep.subr.mxu0 0.0
        %1036 = vmatpush1.msra.mxu0 0.0
        %1037 = vmatprep.mubr.f32.mxu0 0.0
        %1038 = vmatmul.mubr.f32.gmra.mrb[0].mxu0 %v876
        %v1039 = vpop.f32.mrb[0].mxu0
        %v1040 = vadd.f32 %v961, %v1039
        %v1041 = vpop.f32.mrb[0].mxu0
        %v1042 = vadd.f32 %v965, %v1041
        %1043 = vmatprep.mubr.f32.mxu0 0.0
        %1044 = vmatmul.mubr.f32.gmra.mrb[0].mxu0 %v877
        %v1045 = vpop.f32.mrb[0].mxu0
        %v1046 = vadd.f32 %v961, %v1045
        %v1047 = vpop.f32.mrb[0].mxu0
        %v1048 = vadd.f32 %v965, %v1047
        %1049 = vmatprep.mubr.f32.mxu0 0.0
        %1050 = vmatmul.mubr.f32.gmra.mrb[0].mxu0 %v878
        %v1051 = vpop.f32.mrb[0].mxu0
        %v1052 = vadd.f32 %v961, %v1051
        %v1053 = vpop.f32.mrb[0].mxu0
        %v1054 = vadd.f32 %v965, %v1053
        %1055 = vmatprep.mubr.f32.mxu0 0.0
        %1056 = vmatmul.mubr.f32.gmra.mrb[0].mxu0 %v879
        %v1057 = vpop.f32.mrb[0].mxu0
        %v1058 = vadd.f32 %v961, %v1057
        %v1059 = vpop.f32.mrb[0].mxu0
        %v1060 = vadd.f32 %v965, %v1059
        %1061 = vmatprep.mubr.f32.mxu0 0.0
        %1062 = vmatmul.mubr.f32.gmra.mrb[0].mxu0 %v880
        %v1063 = vpop.f32.mrb[0].mxu0
        %v1064 = vadd.f32 %v961, %v1063
        %v1065 = vpop.f32.mrb[0].mxu0
        %v1066 = vadd.f32 %v965, %v1065
        %1067 = vmatprep.mubr.f32.mxu0 0.0
        %1068 = vmatmul.mubr.f32.gmra.mrb[0].mxu0 %v881
        %v1069 = vpop.f32.mrb[0].mxu0
        %v1070 = vadd.f32 %v961, %v1069
        %v1071 = vpop.f32.mrb[0].mxu0
        %v1072 = vadd.f32 %v965, %v1071
        %1073 = vmatprep.mubr.f32.mxu0 0.0
        %1074 = vmatmul.mubr.f32.gmra.mrb[0].mxu0 %v882
        %v1075 = vpop.f32.mrb[0].mxu0
        %v1076 = vadd.f32 %v961, %v1075
        %v1077 = vpop.f32.mrb[0].mxu0
        %v1078 = vadd.f32 %v965, %v1077
        %1079 = vmatprep.mubr.f32.mxu0 0.0
        %1080 = vmatmul.mubr.f32.gmra.mrb[0].mxu0 %v883
        %v1081 = vpop.f32.mrb[0].mxu0
        %v1082 = vadd.f32 %v961, %v1081
        %v1083 = vpop.f32.mrb[0].mxu0
        %v1084 = vadd.f32 %v965, %v1083
        %1085 = vmatprep.mubr.f32.mxu0 0.0
        %1086 = vmatmul.mubr.f32.gmra.mrb[0].mxu0 %v884
        %v1087 = vpop.f32.mrb[0].mxu0
        %v1088 = vadd.f32 %v961, %v1087
        %v1089 = vpop.f32.mrb[0].mxu0
        %v1090 = vadd.f32 %v965, %v1089
        %1091 = vmatprep.mubr.f32.mxu0 0.0
        %1092 = vmatmul.mubr.f32.gmra.mrb[0].mxu0 %v885
        %v1093 = vpop.f32.mrb[0].mxu0
        %v1094 = vadd.f32 %v961, %v1093
        %v1095 = vpop.f32.mrb[0].mxu0
        %v1096 = vadd.f32 %v965, %v1095
        %1097 = vmatprep.mubr.f32.mxu0 0.0
        %1098 = vmatmul.mubr.f32.gmra.mrb[0].mxu0 %v886
        %v1099 = vpop.f32.mrb[0].mxu0
        %v1100 = vadd.f32 %v961, %v1099
        %v1101 = vpop.f32.mrb[0].mxu0
        %v1102 = vadd.f32 %v965, %v1101
        %1103 = vmatprep.mubr.f32.mxu0 0.0
        %1104 = vmatmul.mubr.f32.gmra.mrb[0].mxu0 %v887
        %v1105 = vpop.f32.mrb[0].mxu0
        %v1106 = vadd.f32 %v961, %v1105
        %v1107 = vpop.f32.mrb[0].mxu0
        %v1108 = vadd.f32 %v965, %v1107
        %1109 = vmatprep.mubr.f32.mxu0 0.0
        %1110 = vmatmul.mubr.f32.gmra.mrb[0].mxu0 %v888
        %v1111 = vpop.f32.mrb[0].mxu0
        %v1112 = vadd.f32 %v961, %v1111
        %v1113 = vpop.f32.mrb[0].mxu0
        %v1114 = vadd.f32 %v965, %v1113
        %1115 = vmatprep.mubr.f32.mxu0 0.0
        %1116 = vmatmul.mubr.f32.gmra.mrb[0].mxu0 %v889
        %v1117 = vpop.f32.mrb[0].mxu0
        %v1118 = vadd.f32 %v961, %v1117
        %v1119 = vpop.f32.mrb[0].mxu0
        %v1120 = vadd.f32 %v965, %v1119
        %1121 = vmatprep.mubr.f32.mxu0 0.0
        %1122 = vmatmul.mubr.f32.gmra.mrb[0].mxu0 %v890
        %v1123 = vpop.f32.mrb[0].mxu0
        %v1124 = vadd.f32 %v961, %v1123
        %v1125 = vpop.f32.mrb[0].mxu0
        %v1126 = vadd.f32 %v965, %v1125
        %1127 = vmatprep.mubr.f32.mxu0 0.0
        %1128 = vmatmul.mubr.f32.gmra.mrb[0].mxu0 %v891
        %v1129 = vpop.f32.mrb[0].mxu0
        %v1130 = vadd.f32 %v961, %v1129
        %v1131 = vpop.f32.mrb[0].mxu0
        %v1132 = vadd.f32 %v965, %v1131
        %1133 = vmatprep.mubr.f32.mxu0 0.0
        %1134 = vmatmul.mubr.f32.gmra.mrb[0].mxu0 %v892
        %v1135 = vpop.f32.mrb[0].mxu0
        %v1136 = vadd.f32 %v961, %v1135
        %v1137 = vpop.f32.mrb[0].mxu0
        %v1138 = vadd.f32 %v965, %v1137
        %1139 = vmatprep.mubr.f32.mxu0 0.0
        %1140 = vmatmul.mubr.f32.gmra.mrb[0].mxu0 %v893
        %v1141 = vpop.f32.mrb[0].mxu0
        %v1142 = vadd.f32 %v961, %v1141
        %v1143 = vpop.f32.mrb[0].mxu0
        %v1144 = vadd.f32 %v965, %v1143
        %1145 = vmatprep.mubr.f32.mxu0 0.0
        %1146 = vmatmul.mubr.f32.gmra.mrb[0].mxu0 %v894
        %v1147 = vpop.f32.mrb[0].mxu0
        %v1148 = vadd.f32 %v961, %v1147
        %v1149 = vpop.f32.mrb[0].mxu0
        %v1150 = vadd.f32 %v965, %v1149
        %1151 = vmatprep.mubr.f32.mxu0 0.0
        %1152 = vmatmul.mubr.f32.gmra.mrb[0].mxu0 %v895
        %v1153 = vpop.f32.mrb[0].mxu0
        %v1154 = vadd.f32 %v961, %v1153
        %v1155 = vpop.f32.mrb[0].mxu0
        %v1156 = vadd.f32 %v965, %v1155
        %1157 = vmatprep.mubr.f32.mxu0 0.0
        %1158 = vmatmul.mubr.f32.gmra.mrb[0].mxu0 %v896
        %v1159 = vpop.f32.mrb[0].mxu0
        %v1160 = vadd.f32 %v961, %v1159
        %v1161 = vpop.f32.mrb[0].mxu0
        %v1162 = vadd.f32 %v965, %v1161
        %1163 = vmatprep.mubr.f32.mxu0 0.0
        %1164 = vmatmul.mubr.f32.gmra.mrb[0].mxu0 %v897
        %v1165 = vpop.f32.mrb[0].mxu0
        %v1166 = vadd.f32 %v961, %v1165
        %v1167 = vpop.f32.mrb[0].mxu0
        %v1168 = vadd.f32 %v965, %v1167
        %1169 = vmatprep.mubr.f32.mxu0 0.0
        %1170 = vmatmul.mubr.f32.gmra.mrb[0].mxu0 %v898
        %v1171 = vpop.f32.mrb[0].mxu0
        %v1172 = vadd.f32 %v961, %v1171
        %v1173 = vpop.f32.mrb[0].mxu0
        %v1174 = vadd.f32 %v965, %v1173
        %1175 = vmatprep.mubr.f32.mxu0 0.0
        %1176 = vmatmul.mubr.f32.gmra.mrb[0].mxu0 %v899
        %v1177 = vpop.f32.mrb[0].mxu0
        %v1178 = vadd.f32 %v961, %v1177
        %v1179 = vpop.f32.mrb[0].mxu0
        %v1180 = vadd.f32 %v965, %v1179
        %1181 = vmatprep.mubr.f32.mxu0 0.0
        %1182 = vmatmul.mubr.f32.gmra.mrb[0].mxu0 %v900
        %v1183 = vpop.f32.mrb[0].mxu0
        %v1184 = vadd.f32 %v961, %v1183
        %v1185 = vpop.f32.mrb[0].mxu0
        %v1186 = vadd.f32 %v965, %v1185
        %1187 = vmatprep.mubr.f32.mxu0 0.0
        %1188 = vmatmul.mubr.f32.gmra.mrb[0].mxu0 %v901
        %v1189 = vpop.f32.mrb[0].mxu0
        %v1190 = vadd.f32 %v961, %v1189
        %v1191 = vpop.f32.mrb[0].mxu0
        %v1192 = vadd.f32 %v965, %v1191
        %1193 = vmatprep.mubr.f32.mxu0 0.0
        %1194 = vmatmul.mubr.f32.gmra.mrb[0].mxu0 %v902
        %v1195 = vpop.f32.mrb[0].mxu0
        %v1196 = vadd.f32 %v961, %v1195
        %v1197 = vpop.f32.mrb[0].mxu0
        %v1198 = vadd.f32 %v965, %v1197
        %1199 = vmatprep.mubr.f32.mxu0 0.0
        %1200 = vmatmul.mubr.f32.gmra.mrb[0].mxu0 %v903
        %v1201 = vpop.f32.mrb[0].mxu0
        %v1202 = vadd.f32 %v961, %v1201
        %v1203 = vpop.f32.mrb[0].mxu0
        %v1204 = vadd.f32 %v965, %v1203
        %1205 = vmatprep.mubr.f32.mxu0 0.0
        %1206 = vmatmul.mubr.f32.gmra.mrb[0].mxu0 %v904
        %v1207 = vpop.f32.mrb[0].mxu0
        %v1208 = vadd.f32 %v961, %v1207
        %v1209 = vpop.f32.mrb[0].mxu0
        %v1210 = vadd.f32 %v965, %v1209
        %1211 = vmatprep.mubr.f32.mxu0 0.0
        %1212 = vmatmul.mubr.f32.gmra.mrb[0].mxu0 %v905
        %v1213 = vpop.f32.mrb[0].mxu0
        %v1214 = vadd.f32 %v961, %v1213
        %v1215 = vpop.f32.mrb[0].mxu0
        %v1216 = vadd.f32 %v965, %v1215
        %1217 = vmatprep.mubr.f32.mxu0 0.0
        %1218 = vmatmul.mubr.f32.gmra.mrb[0].mxu0 %v906
        %v1219 = vpop.f32.mrb[0].mxu0
        %v1220 = vadd.f32 %v961, %v1219
        %v1221 = vpop.f32.mrb[0].mxu0
        %v1222 = vadd.f32 %v965, %v1221
        %1223 = vmatprep.mubr.f32.mxu0 0.0
        %1224 = vmatmul.mubr.f32.gmra.mrb[0].mxu0 %v907
        %v1225 = vpop.f32.mrb[0].mxu0
        %v1226 = vadd.f32 %v961, %v1225
        %v1227 = vpop.f32.mrb[0].mxu0
        %v1228 = vadd.f32 %v965, %v1227
        %1229 = vdwg.mxu0
        %1230 = vmatprep.subr.mxu0 0.0
        %1231 = vmatpush1.msra.mxu0 %v910
        %1232 = vmatprep.subr.mxu0 0.0
        %1233 = vmatpush1.msra.mxu0 %v913
        %1234 = vmatprep.subr.mxu0 0.0
        %1235 = vmatpush1.msra.mxu0 %v916
        %1236 = vmatprep.subr.mxu0 0.0
        %1237 = vmatpush1.msra.mxu0 %v919
        %1238 = vmatprep.subr.mxu0 0.0
        %1239 = vmatpush1.msra.mxu0 %v922
        %1240 = vmatprep.subr.mxu0 0.0
        %1241 = vmatpush1.msra.mxu0 %v925
        %1242 = vmatprep.subr.mxu0 0.0
        %1243 = vmatpush1.msra.mxu0 %v928
        %1244 = vmatprep.subr.mxu0 0.0
        %1245 = vmatpush1.msra.mxu0 %v931
        %1246 = vmatprep.subr.mxu0 0.0
        %1247 = vmatpush1.msra.mxu0 %v934
        %1248 = vmatprep.subr.mxu0 0.0
        %1249 = vmatpush1.msra.mxu0 %v937
        %1250 = vmatprep.subr.mxu0 0.0
        %1251 = vmatpush1.msra.mxu0 %v940
        %1252 = vmatprep.subr.mxu0 0.0
        %1253 = vmatpush1.msra.mxu0 %v943
        %1254 = vmatprep.subr.mxu0 0.0
        %1255 = vmatpush1.msra.mxu0 %v946
        %1256 = vmatprep.subr.mxu0 0.0
        %1257 = vmatpush1.msra.mxu0 %v949
        %1258 = vmatprep.subr.mxu0 0.0
        %1259 = vmatpush1.msra.mxu0 %v952
        %1260 = vmatprep.subr.mxu0 0.0
        %1261 = vmatpush1.msra.mxu0 %v955
        %1262 = vmatprep.subr.mxu0 0.0
        %1263 = vmatpush1.msra.mxu0 0.0
        %1264 = vmatprep.subr.mxu0 0.0
        %1265 = vmatpush1.msra.mxu0 0.0
        %1266 = vmatprep.subr.mxu0 0.0
        %1267 = vmatpush1.msra.mxu0 0.0
        %1268 = vmatprep.subr.mxu0 0.0
        %1269 = vmatpush1.msra.mxu0 0.0
        %1270 = vmatprep.subr.mxu0 0.0
        %1271 = vmatpush1.msra.mxu0 0.0
        %1272 = vmatprep.subr.mxu0 0.0
        %1273 = vmatpush1.msra.mxu0 0.0
        %1274 = vmatprep.subr.mxu0 0.0
        %1275 = vmatpush1.msra.mxu0 0.0
        %1276 = vmatprep.subr.mxu0 0.0
        %1277 = vmatpush1.msra.mxu0 0.0
        %1278 = vmatprep.subr.mxu0 0.0
        %1279 = vmatpush1.msra.mxu0 0.0
        %1280 = vmatprep.subr.mxu0 0.0
        %1281 = vmatpush1.msra.mxu0 0.0
        %1282 = vmatprep.subr.mxu0 0.0
        %1283 = vmatpush1.msra.mxu0 0.0
        %1284 = vmatprep.subr.mxu0 0.0
        %1285 = vmatpush1.msra.mxu0 0.0
        %1286 = vmatprep.subr.mxu0 0.0
        %1287 = vmatpush1.msra.mxu0 0.0
        %1288 = vmatprep.subr.mxu0 0.0
        %1289 = vmatpush1.msra.mxu0 0.0
        %1290 = vmatprep.subr.mxu0 0.0
        %1291 = vmatpush1.msra.mxu0 0.0
        %1292 = vmatprep.subr.mxu0 0.0
        %1293 = vmatpush1.msra.mxu0 0.0
        %1294 = vmatprep.mubr.f32.mxu0 0.0
        %1295 = vmatmul.mubr.f32.gmra.mrb[0].mxu0 %v876
        %v1296 = vpop.f32.mrb[0].mxu0
        %v1297 = vadd.f32 %v969, %v1296
        %v1298 = vpop.f32.mrb[0].mxu0
        %1299 = vmatprep.mubr.f32.mxu0 0.0
        %1300 = vmatmul.mubr.f32.gmra.mrb[0].mxu0 %v877
        %v1301 = vpop.f32.mrb[0].mxu0
        %v1302 = vadd.f32 %v969, %v1301
        %v1303 = vpop.f32.mrb[0].mxu0
        %1304 = vmatprep.mubr.f32.mxu0 0.0
        %1305 = vmatmul.mubr.f32.gmra.mrb[0].mxu0 %v878
        %v1306 = vpop.f32.mrb[0].mxu0
        %v1307 = vadd.f32 %v969, %v1306
        %v1308 = vpop.f32.mrb[0].mxu0
        %1309 = vmatprep.mubr.f32.mxu0 0.0
        %1310 = vmatmul.mubr.f32.gmra.mrb[0].mxu0 %v879
        %v1311 = vpop.f32.mrb[0].mxu0
        %v1312 = vadd.f32 %v969, %v1311
        %v1313 = vpop.f32.mrb[0].mxu0
        %1314 = vmatprep.mubr.f32.mxu0 0.0
        %1315 = vmatmul.mubr.f32.gmra.mrb[0].mxu0 %v880
        %v1316 = vpop.f32.mrb[0].mxu0
        %v1317 = vadd.f32 %v969, %v1316
        %v1318 = vpop.f32.mrb[0].mxu0
        %1319 = vmatprep.mubr.f32.mxu0 0.0
        %1320 = vmatmul.mubr.f32.gmra.mrb[0].mxu0 %v881
        %v1321 = vpop.f32.mrb[0].mxu0
        %v1322 = vadd.f32 %v969, %v1321
        %v1323 = vpop.f32.mrb[0].mxu0
        %1324 = vmatprep.mubr.f32.mxu0 0.0
        %1325 = vmatmul.mubr.f32.gmra.mrb[0].mxu0 %v882
        %v1326 = vpop.f32.mrb[0].mxu0
        %v1327 = vadd.f32 %v969, %v1326
        %v1328 = vpop.f32.mrb[0].mxu0
        %1329 = vmatprep.mubr.f32.mxu0 0.0
        %1330 = vmatmul.mubr.f32.gmra.mrb[0].mxu0 %v883
        %v1331 = vpop.f32.mrb[0].mxu0
        %v1332 = vadd.f32 %v969, %v1331
        %v1333 = vpop.f32.mrb[0].mxu0
        %1334 = vmatprep.mubr.f32.mxu0 0.0
        %1335 = vmatmul.mubr.f32.gmra.mrb[0].mxu0 %v884
        %v1336 = vpop.f32.mrb[0].mxu0
        %v1337 = vadd.f32 %v969, %v1336
        %v1338 = vpop.f32.mrb[0].mxu0
        %1339 = vmatprep.mubr.f32.mxu0 0.0
        %1340 = vmatmul.mubr.f32.gmra.mrb[0].mxu0 %v885
        %v1341 = vpop.f32.mrb[0].mxu0
        %v1342 = vadd.f32 %v969, %v1341
        %v1343 = vpop.f32.mrb[0].mxu0
        %1344 = vmatprep.mubr.f32.mxu0 0.0
        %1345 = vmatmul.mubr.f32.gmra.mrb[0].mxu0 %v886
        %v1346 = vpop.f32.mrb[0].mxu0
        %v1347 = vadd.f32 %v969, %v1346
        %v1348 = vpop.f32.mrb[0].mxu0
        %1349 = vmatprep.mubr.f32.mxu0 0.0
        %1350 = vmatmul.mubr.f32.gmra.mrb[0].mxu0 %v887
        %v1351 = vpop.f32.mrb[0].mxu0
        %v1352 = vadd.f32 %v969, %v1351
        %v1353 = vpop.f32.mrb[0].mxu0
        %1354 = vmatprep.mubr.f32.mxu0 0.0
        %1355 = vmatmul.mubr.f32.gmra.mrb[0].mxu0 %v888
        %v1356 = vpop.f32.mrb[0].mxu0
        %v1357 = vadd.f32 %v969, %v1356
        %v1358 = vpop.f32.mrb[0].mxu0
        %1359 = vmatprep.mubr.f32.mxu0 0.0
        %1360 = vmatmul.mubr.f32.gmra.mrb[0].mxu0 %v889
        %v1361 = vpop.f32.mrb[0].mxu0
        %v1362 = vadd.f32 %v969, %v1361
        %v1363 = vpop.f32.mrb[0].mxu0
        %1364 = vmatprep.mubr.f32.mxu0 0.0
        %1365 = vmatmul.mubr.f32.gmra.mrb[0].mxu0 %v890
        %v1366 = vpop.f32.mrb[0].mxu0
        %v1367 = vadd.f32 %v969, %v1366
        %v1368 = vpop.f32.mrb[0].mxu0
        %1369 = vmatprep.mubr.f32.mxu0 0.0
        %1370 = vmatmul.mubr.f32.gmra.mrb[0].mxu0 %v891
        %v1371 = vpop.f32.mrb[0].mxu0
        %v1372 = vadd.f32 %v969, %v1371
        %v1373 = vpop.f32.mrb[0].mxu0
        %1374 = vmatprep.mubr.f32.mxu0 0.0
        %1375 = vmatmul.mubr.f32.gmra.mrb[0].mxu0 %v892
        %v1376 = vpop.f32.mrb[0].mxu0
        %v1377 = vadd.f32 %v969, %v1376
        %v1378 = vpop.f32.mrb[0].mxu0
        %1379 = vmatprep.mubr.f32.mxu0 0.0
        %1380 = vmatmul.mubr.f32.gmra.mrb[0].mxu0 %v893
        %v1381 = vpop.f32.mrb[0].mxu0
        %v1382 = vadd.f32 %v969, %v1381
        %v1383 = vpop.f32.mrb[0].mxu0
        %1384 = vmatprep.mubr.f32.mxu0 0.0
        %1385 = vmatmul.mubr.f32.gmra.mrb[0].mxu0 %v894
        %v1386 = vpop.f32.mrb[0].mxu0
        %v1387 = vadd.f32 %v969, %v1386
        %v1388 = vpop.f32.mrb[0].mxu0
        %1389 = vmatprep.mubr.f32.mxu0 0.0
        %1390 = vmatmul.mubr.f32.gmra.mrb[0].mxu0 %v895
        %v1391 = vpop.f32.mrb[0].mxu0
        %v1392 = vadd.f32 %v969, %v1391
        %v1393 = vpop.f32.mrb[0].mxu0
        %1394 = vmatprep.mubr.f32.mxu0 0.0
        %1395 = vmatmul.mubr.f32.gmra.mrb[0].mxu0 %v896
        %v1396 = vpop.f32.mrb[0].mxu0
        %v1397 = vadd.f32 %v969, %v1396
        %v1398 = vpop.f32.mrb[0].mxu0
        %1399 = vmatprep.mubr.f32.mxu0 0.0
        %1400 = vmatmul.mubr.f32.gmra.mrb[0].mxu0 %v897
        %v1401 = vpop.f32.mrb[0].mxu0
        %v1402 = vadd.f32 %v969, %v1401
        %v1403 = vpop.f32.mrb[0].mxu0
        %1404 = vmatprep.mubr.f32.mxu0 0.0
        %1405 = vmatmul.mubr.f32.gmra.mrb[0].mxu0 %v898
        %v1406 = vpop.f32.mrb[0].mxu0
        %v1407 = vadd.f32 %v969, %v1406
        %v1408 = vpop.f32.mrb[0].mxu0
        %1409 = vmatprep.mubr.f32.mxu0 0.0
        %1410 = vmatmul.mubr.f32.gmra.mrb[0].mxu0 %v899
        %v1411 = vpop.f32.mrb[0].mxu0
        %v1412 = vadd.f32 %v969, %v1411
        %v1413 = vpop.f32.mrb[0].mxu0
        %1414 = vmatprep.mubr.f32.mxu0 0.0
        %1415 = vmatmul.mubr.f32.gmra.mrb[0].mxu0 %v900
        %v1416 = vpop.f32.mrb[0].mxu0
        %v1417 = vadd.f32 %v969, %v1416
        %v1418 = vpop.f32.mrb[0].mxu0
        %1419 = vmatprep.mubr.f32.mxu0 0.0
        %1420 = vmatmul.mubr.f32.gmra.mrb[0].mxu0 %v901
        %v1421 = vpop.f32.mrb[0].mxu0
        %v1422 = vadd.f32 %v969, %v1421
        %v1423 = vpop.f32.mrb[0].mxu0
        %1424 = vmatprep.mubr.f32.mxu0 0.0
        %1425 = vmatmul.mubr.f32.gmra.mrb[0].mxu0 %v902
        %v1426 = vpop.f32.mrb[0].mxu0
        %v1427 = vadd.f32 %v969, %v1426
        %v1428 = vpop.f32.mrb[0].mxu0
        %1429 = vmatprep.mubr.f32.mxu0 0.0
        %1430 = vmatmul.mubr.f32.gmra.mrb[0].mxu0 %v903
        %v1431 = vpop.f32.mrb[0].mxu0
        %v1432 = vadd.f32 %v969, %v1431
        %v1433 = vpop.f32.mrb[0].mxu0
        %1434 = vmatprep.mubr.f32.mxu0 0.0
        %1435 = vmatmul.mubr.f32.gmra.mrb[0].mxu0 %v904
        %v1436 = vpop.f32.mrb[0].mxu0
        %v1437 = vadd.f32 %v969, %v1436
        %v1438 = vpop.f32.mrb[0].mxu0
        %1439 = vmatprep.mubr.f32.mxu0 0.0
        %1440 = vmatmul.mubr.f32.gmra.mrb[0].mxu0 %v905
        %v1441 = vpop.f32.mrb[0].mxu0
        %v1442 = vadd.f32 %v969, %v1441
        %v1443 = vpop.f32.mrb[0].mxu0
        %1444 = vmatprep.mubr.f32.mxu0 0.0
        %1445 = vmatmul.mubr.f32.gmra.mrb[0].mxu0 %v906
        %v1446 = vpop.f32.mrb[0].mxu0
        %v1447 = vadd.f32 %v969, %v1446
        %v1448 = vpop.f32.mrb[0].mxu0
        %1449 = vmatprep.mubr.f32.mxu0 0.0
        %1450 = vmatmul.mubr.f32.gmra.mrb[0].mxu0 %v907
        %v1451 = vpop.f32.mrb[0].mxu0
        %v1452 = vadd.f32 %v969, %v1451
        %v1453 = vpop.f32.mrb[0].mxu0
        %1454 = vdwg.mxu0
        %v1455 = vmul.f32 %v1040, 0.5
        %v1456 = vmul.f32 %v1042, 0.5
        %v1457 = vmul.f32 %v1297, 0.5
        %v1458 = vmul.f32 %v1046, 0.5
        %v1459 = vmul.f32 %v1048, 0.5
        %v1460 = vmul.f32 %v1302, 0.5
        %v1461 = vmul.f32 %v1052, 0.5
        %v1462 = vmul.f32 %v1054, 0.5
        %v1463 = vmul.f32 %v1307, 0.5
        %v1464 = vmul.f32 %v1058, 0.5
        %v1465 = vmul.f32 %v1060, 0.5
        %v1466 = vmul.f32 %v1312, 0.5
        %v1467 = vmul.f32 %v1064, 0.5
        %v1468 = vmul.f32 %v1066, 0.5
        %v1469 = vmul.f32 %v1317, 0.5
        %v1470 = vmul.f32 %v1070, 0.5
        %v1471 = vmul.f32 %v1072, 0.5
        %v1472 = vmul.f32 %v1322, 0.5
        %v1473 = vmul.f32 %v1076, 0.5
        %v1474 = vmul.f32 %v1078, 0.5
        %v1475 = vmul.f32 %v1327, 0.5
        %v1476 = vmul.f32 %v1082, 0.5
        %v1477 = vmul.f32 %v1084, 0.5
        %v1478 = vmul.f32 %v1332, 0.5
        %v1479 = vmul.f32 %v1088, 0.5
        %v1480 = vmul.f32 %v1090, 0.5
        %v1481 = vmul.f32 %v1337, 0.5
        %v1482 = vmul.f32 %v1094, 0.5
        %v1483 = vmul.f32 %v1096, 0.5
        %v1484 = vmul.f32 %v1342, 0.5
        %v1485 = vmul.f32 %v1100, 0.5
        %v1486 = vmul.f32 %v1102, 0.5
        %v1487 = vmul.f32 %v1347, 0.5
        %v1488 = vmul.f32 %v1106, 0.5
        %v1489 = vmul.f32 %v1108, 0.5
        %v1490 = vmul.f32 %v1352, 0.5
        %v1491 = vmul.f32 %v1112, 0.5
        %v1492 = vmul.f32 %v1114, 0.5
        %v1493 = vmul.f32 %v1357, 0.5
        %v1494 = vmul.f32 %v1118, 0.5
        %v1495 = vmul.f32 %v1120, 0.5
        %v1496 = vmul.f32 %v1362, 0.5
        %v1497 = vmul.f32 %v1124, 0.5
        %v1498 = vmul.f32 %v1126, 0.5
        %v1499 = vmul.f32 %v1367, 0.5
        %v1500 = vmul.f32 %v1130, 0.5
        %v1501 = vmul.f32 %v1132, 0.5
        %v1502 = vmul.f32 %v1372, 0.5
        %v1503 = vmul.f32 %v1136, 0.5
        %v1504 = vmul.f32 %v1138, 0.5
        %v1505 = vmul.f32 %v1377, 0.5
        %v1506 = vmul.f32 %v1142, 0.5
        %v1507 = vmul.f32 %v1144, 0.5
        %v1508 = vmul.f32 %v1382, 0.5
        %v1509 = vmul.f32 %v1148, 0.5
        %v1510 = vmul.f32 %v1150, 0.5
        %v1511 = vmul.f32 %v1387, 0.5
        %v1512 = vmul.f32 %v1154, 0.5
        %v1513 = vmul.f32 %v1156, 0.5
        %v1514 = vmul.f32 %v1392, 0.5
        %v1515 = vmul.f32 %v1160, 0.5
        %v1516 = vmul.f32 %v1162, 0.5
        %v1517 = vmul.f32 %v1397, 0.5
        %v1518 = vmul.f32 %v1166, 0.5
        %v1519 = vmul.f32 %v1168, 0.5
        %v1520 = vmul.f32 %v1402, 0.5
        %v1521 = vmul.f32 %v1172, 0.5
        %v1522 = vmul.f32 %v1174, 0.5
        %v1523 = vmul.f32 %v1407, 0.5
        %v1524 = vmul.f32 %v1178, 0.5
        %v1525 = vmul.f32 %v1180, 0.5
        %v1526 = vmul.f32 %v1412, 0.5
        %v1527 = vmul.f32 %v1184, 0.5
        %v1528 = vmul.f32 %v1186, 0.5
        %v1529 = vmul.f32 %v1417, 0.5
        %v1530 = vmul.f32 %v1190, 0.5
        %v1531 = vmul.f32 %v1192, 0.5
        %v1532 = vmul.f32 %v1422, 0.5
        %v1533 = vmul.f32 %v1196, 0.5
        %v1534 = vmul.f32 %v1198, 0.5
        %v1535 = vmul.f32 %v1427, 0.5
        %v1536 = vmul.f32 %v1202, 0.5
        %v1537 = vmul.f32 %v1204, 0.5
        %v1538 = vmul.f32 %v1432, 0.5
        %v1539 = vmul.f32 %v1208, 0.5
        %v1540 = vmul.f32 %v1210, 0.5
        %v1541 = vmul.f32 %v1437, 0.5
        %v1542 = vmul.f32 %v1214, 0.5
        %v1543 = vmul.f32 %v1216, 0.5
        %v1544 = vmul.f32 %v1442, 0.5
        %v1545 = vmul.f32 %v1220, 0.5
        %v1546 = vmul.f32 %v1222, 0.5
        %v1547 = vmul.f32 %v1447, 0.5
        %v1548 = vmul.f32 %v1226, 0.5
        %v1549 = vmul.f32 %v1228, 0.5
        %v1550 = vmul.f32 %v1452, 0.5
        %v1551 = vtanh.pop %v1455
        %v1552 = vtanh.pop %v1456
        %v1553 = vtanh.pop %v1457
        %v1554 = vtanh.pop %v1458
        %v1555 = vtanh.pop %v1459
        %v1556 = vtanh.pop %v1460
        %v1557 = vtanh.pop %v1461
        %v1558 = vtanh.pop %v1462
        %v1559 = vtanh.pop %v1463
        %v1560 = vtanh.pop %v1464
        %v1561 = vtanh.pop %v1465
        %v1562 = vtanh.pop %v1466
        %v1563 = vtanh.pop %v1467
        %v1564 = vtanh.pop %v1468
        %v1565 = vtanh.pop %v1469
        %v1566 = vtanh.pop %v1470
        %v1567 = vtanh.pop %v1471
        %v1568 = vtanh.pop %v1472
        %v1569 = vtanh.pop %v1473
        %v1570 = vtanh.pop %v1474
        %v1571 = vtanh.pop %v1475
        %v1572 = vtanh.pop %v1476
        %v1573 = vtanh.pop %v1477
        %v1574 = vtanh.pop %v1478
        %v1575 = vtanh.pop %v1479
        %v1576 = vtanh.pop %v1480
        %v1577 = vtanh.pop %v1481
        %v1578 = vtanh.pop %v1482
        %v1579 = vtanh.pop %v1483
        %v1580 = vtanh.pop %v1484
        %v1581 = vtanh.pop %v1485
        %v1582 = vtanh.pop %v1486
        %v1583 = vtanh.pop %v1487
        %v1584 = vtanh.pop %v1488
        %v1585 = vtanh.pop %v1489
        %v1586 = vtanh.pop %v1490
        %v1587 = vtanh.pop %v1491
        %v1588 = vtanh.pop %v1492
        %v1589 = vtanh.pop %v1493
        %v1590 = vtanh.pop %v1494
        %v1591 = vtanh.pop %v1495
        %v1592 = vtanh.pop %v1496
        %v1593 = vtanh.pop %v1497
        %v1594 = vtanh.pop %v1498
        %v1595 = vtanh.pop %v1499
        %v1596 = vtanh.pop %v1500
        %v1597 = vtanh.pop %v1501
        %v1598 = vtanh.pop %v1502
        %v1599 = vtanh.pop %v1503
        %v1600 = vtanh.pop %v1504
        %v1601 = vtanh.pop %v1505
        %v1602 = vtanh.pop %v1506
        %v1603 = vtanh.pop %v1507
        %v1604 = vtanh.pop %v1508
        %v1605 = vtanh.pop %v1509
        %v1606 = vtanh.pop %v1510
        %v1607 = vtanh.pop %v1511
        %v1608 = vtanh.pop %v1512
        %v1609 = vtanh.pop %v1513
        %v1610 = vtanh.pop %v1514
        %v1611 = vtanh.pop %v1515
        %v1612 = vtanh.pop %v1516
        %v1613 = vtanh.pop %v1517
        %v1614 = vtanh.pop %v1518
        %v1615 = vtanh.pop %v1519
        %v1616 = vtanh.pop %v1520
        %v1617 = vtanh.pop %v1521
        %v1618 = vtanh.pop %v1522
        %v1619 = vtanh.pop %v1523
        %v1620 = vtanh.pop %v1524
        %v1621 = vtanh.pop %v1525
        %v1622 = vtanh.pop %v1526
        %v1623 = vtanh.pop %v1527
        %v1624 = vtanh.pop %v1528
        %v1625 = vtanh.pop %v1529
        %v1626 = vtanh.pop %v1530
        %v1627 = vtanh.pop %v1531
        %v1628 = vtanh.pop %v1532
        %v1629 = vtanh.pop %v1533
        %v1630 = vtanh.pop %v1534
        %v1631 = vtanh.pop %v1535
        %v1632 = vtanh.pop %v1536
        %v1633 = vtanh.pop %v1537
        %v1634 = vtanh.pop %v1538
        %v1635 = vtanh.pop %v1539
        %v1636 = vtanh.pop %v1540
        %v1637 = vtanh.pop %v1541
        %v1638 = vtanh.pop %v1542
        %v1639 = vtanh.pop %v1543
        %v1640 = vtanh.pop %v1544
        %v1641 = vtanh.pop %v1545
        %v1642 = vtanh.pop %v1546
        %v1643 = vtanh.pop %v1547
        %v1644 = vtanh.pop %v1548
        %v1645 = vtanh.pop %v1549
        %v1646 = vtanh.pop %v1550
        %v1647 = vmul.f32 %v1551, 0.5
        %v1648 = vmul.f32 %v1552, 0.5
        %v1649 = vmul.f32 %v1553, 0.5
        %v1650 = vmul.f32 %v1554, 0.5
        %v1651 = vmul.f32 %v1555, 0.5
        %v1652 = vmul.f32 %v1556, 0.5
        %v1653 = vmul.f32 %v1557, 0.5
        %v1654 = vmul.f32 %v1558, 0.5
        %v1655 = vmul.f32 %v1559, 0.5
        %v1656 = vmul.f32 %v1560, 0.5
        %v1657 = vmul.f32 %v1561, 0.5
        %v1658 = vmul.f32 %v1562, 0.5
        %v1659 = vmul.f32 %v1563, 0.5
        %v1660 = vmul.f32 %v1564, 0.5
        %v1661 = vmul.f32 %v1565, 0.5
        %v1662 = vmul.f32 %v1566, 0.5
        %v1663 = vmul.f32 %v1567, 0.5
        %v1664 = vmul.f32 %v1568, 0.5
        %v1665 = vmul.f32 %v1569, 0.5
        %v1666 = vmul.f32 %v1570, 0.5
        %v1667 = vmul.f32 %v1571, 0.5
        %v1668 = vmul.f32 %v1572, 0.5
        %v1669 = vmul.f32 %v1573, 0.5
        %v1670 = vmul.f32 %v1574, 0.5
        %v1671 = vmul.f32 %v1575, 0.5
        %v1672 = vmul.f32 %v1576, 0.5
        %v1673 = vmul.f32 %v1577, 0.5
        %v1674 = vmul.f32 %v1578, 0.5
        %v1675 = vmul.f32 %v1579, 0.5
        %v1676 = vmul.f32 %v1580, 0.5
        %v1677 = vmul.f32 %v1581, 0.5
        %v1678 = vmul.f32 %v1582, 0.5
        %v1679 = vmul.f32 %v1583, 0.5
        %v1680 = vmul.f32 %v1584, 0.5
        %v1681 = vmul.f32 %v1585, 0.5
        %v1682 = vmul.f32 %v1586, 0.5
        %v1683 = vmul.f32 %v1587, 0.5
        %v1684 = vmul.f32 %v1588, 0.5
        %v1685 = vmul.f32 %v1589, 0.5
        %v1686 = vmul.f32 %v1590, 0.5
        %v1687 = vmul.f32 %v1591, 0.5
        %v1688 = vmul.f32 %v1592, 0.5
        %v1689 = vmul.f32 %v1593, 0.5
        %v1690 = vmul.f32 %v1594, 0.5
        %v1691 = vmul.f32 %v1595, 0.5
        %v1692 = vmul.f32 %v1596, 0.5
        %v1693 = vmul.f32 %v1597, 0.5
        %v1694 = vmul.f32 %v1598, 0.5
        %v1695 = vmul.f32 %v1599, 0.5
        %v1696 = vmul.f32 %v1600, 0.5
        %v1697 = vmul.f32 %v1601, 0.5
        %v1698 = vmul.f32 %v1602, 0.5
        %v1699 = vmul.f32 %v1603, 0.5
        %v1700 = vmul.f32 %v1604, 0.5
        %v1701 = vmul.f32 %v1605, 0.5
        %v1702 = vmul.f32 %v1606, 0.5
        %v1703 = vmul.f32 %v1607, 0.5
        %v1704 = vmul.f32 %v1608, 0.5
        %v1705 = vmul.f32 %v1609, 0.5
        %v1706 = vmul.f32 %v1610, 0.5
        %v1707 = vmul.f32 %v1611, 0.5
        %v1708 = vmul.f32 %v1612, 0.5
        %v1709 = vmul.f32 %v1613, 0.5
        %v1710 = vmul.f32 %v1614, 0.5
        %v1711 = vmul.f32 %v1615, 0.5
        %v1712 = vmul.f32 %v1616, 0.5
        %v1713 = vmul.f32 %v1617, 0.5
        %v1714 = vmul.f32 %v1618, 0.5
        %v1715 = vmul.f32 %v1619, 0.5
        %v1716 = vmul.f32 %v1620, 0.5
        %v1717 = vmul.f32 %v1621, 0.5
        %v1718 = vmul.f32 %v1622, 0.5
        %v1719 = vmul.f32 %v1623, 0.5
        %v1720 = vmul.f32 %v1624, 0.5
        %v1721 = vmul.f32 %v1625, 0.5
        %v1722 = vmul.f32 %v1626, 0.5
        %v1723 = vmul.f32 %v1627, 0.5
        %v1724 = vmul.f32 %v1628, 0.5
        %v1725 = vmul.f32 %v1629, 0.5
        %v1726 = vmul.f32 %v1630, 0.5
        %v1727 = vmul.f32 %v1631, 0.5
        %v1728 = vmul.f32 %v1632, 0.5
        %v1729 = vmul.f32 %v1633, 0.5
        %v1730 = vmul.f32 %v1634, 0.5
        %v1731 = vmul.f32 %v1635, 0.5
        %v1732 = vmul.f32 %v1636, 0.5
        %v1733 = vmul.f32 %v1637, 0.5
        %v1734 = vmul.f32 %v1638, 0.5
        %v1735 = vmul.f32 %v1639, 0.5
        %v1736 = vmul.f32 %v1640, 0.5
        %v1737 = vmul.f32 %v1641, 0.5
        %v1738 = vmul.f32 %v1642, 0.5
        %v1739 = vmul.f32 %v1643, 0.5
        %v1740 = vmul.f32 %v1644, 0.5
        %v1741 = vmul.f32 %v1645, 0.5
        %v1742 = vmul.f32 %v1646, 0.5
        %v1743 = vadd.f32 %v1647, 0.5
        %v1744 = vadd.f32 %v1648, 0.5
        %v1745 = vadd.f32 %v1649, 0.5
        %v1746 = vadd.f32 %v1650, 0.5
        %v1747 = vadd.f32 %v1651, 0.5
        %v1748 = vadd.f32 %v1652, 0.5
        %v1749 = vadd.f32 %v1653, 0.5
        %v1750 = vadd.f32 %v1654, 0.5
        %v1751 = vadd.f32 %v1655, 0.5
        %v1752 = vadd.f32 %v1656, 0.5
        %v1753 = vadd.f32 %v1657, 0.5
        %v1754 = vadd.f32 %v1658, 0.5
        %v1755 = vadd.f32 %v1659, 0.5
        %v1756 = vadd.f32 %v1660, 0.5
        %v1757 = vadd.f32 %v1661, 0.5
        %v1758 = vadd.f32 %v1662, 0.5
        %v1759 = vadd.f32 %v1663, 0.5
        %v1760 = vadd.f32 %v1664, 0.5
        %v1761 = vadd.f32 %v1665, 0.5
        %v1762 = vadd.f32 %v1666, 0.5
        %v1763 = vadd.f32 %v1667, 0.5
        %v1764 = vadd.f32 %v1668, 0.5
        %v1765 = vadd.f32 %v1669, 0.5
        %v1766 = vadd.f32 %v1670, 0.5
        %v1767 = vadd.f32 %v1671, 0.5
        %v1768 = vadd.f32 %v1672, 0.5
        %v1769 = vadd.f32 %v1673, 0.5
        %v1770 = vadd.f32 %v1674, 0.5
        %v1771 = vadd.f32 %v1675, 0.5
        %v1772 = vadd.f32 %v1676, 0.5
        %v1773 = vadd.f32 %v1677, 0.5
        %v1774 = vadd.f32 %v1678, 0.5
        %v1775 = vadd.f32 %v1679, 0.5
        %v1776 = vadd.f32 %v1680, 0.5
        %v1777 = vadd.f32 %v1681, 0.5
        %v1778 = vadd.f32 %v1682, 0.5
        %v1779 = vadd.f32 %v1683, 0.5
        %v1780 = vadd.f32 %v1684, 0.5
        %v1781 = vadd.f32 %v1685, 0.5
        %v1782 = vadd.f32 %v1686, 0.5
        %v1783 = vadd.f32 %v1687, 0.5
        %v1784 = vadd.f32 %v1688, 0.5
        %v1785 = vadd.f32 %v1689, 0.5
        %v1786 = vadd.f32 %v1690, 0.5
        %v1787 = vadd.f32 %v1691, 0.5
        %v1788 = vadd.f32 %v1692, 0.5
        %v1789 = vadd.f32 %v1693, 0.5
        %v1790 = vadd.f32 %v1694, 0.5
        %v1791 = vadd.f32 %v1695, 0.5
        %v1792 = vadd.f32 %v1696, 0.5
        %v1793 = vadd.f32 %v1697, 0.5
        %v1794 = vadd.f32 %v1698, 0.5
        %v1795 = vadd.f32 %v1699, 0.5
        %v1796 = vadd.f32 %v1700, 0.5
        %v1797 = vadd.f32 %v1701, 0.5
        %v1798 = vadd.f32 %v1702, 0.5
        %v1799 = vadd.f32 %v1703, 0.5
        %v1800 = vadd.f32 %v1704, 0.5
        %v1801 = vadd.f32 %v1705, 0.5
        %v1802 = vadd.f32 %v1706, 0.5
        %v1803 = vadd.f32 %v1707, 0.5
        %v1804 = vadd.f32 %v1708, 0.5
        %v1805 = vadd.f32 %v1709, 0.5
        %v1806 = vadd.f32 %v1710, 0.5
        %v1807 = vadd.f32 %v1711, 0.5
        %v1808 = vadd.f32 %v1712, 0.5
        %v1809 = vadd.f32 %v1713, 0.5
        %v1810 = vadd.f32 %v1714, 0.5
        %v1811 = vadd.f32 %v1715, 0.5
        %v1812 = vadd.f32 %v1716, 0.5
        %v1813 = vadd.f32 %v1717, 0.5
        %v1814 = vadd.f32 %v1718, 0.5
        %v1815 = vadd.f32 %v1719, 0.5
        %v1816 = vadd.f32 %v1720, 0.5
        %v1817 = vadd.f32 %v1721, 0.5
        %v1818 = vadd.f32 %v1722, 0.5
        %v1819 = vadd.f32 %v1723, 0.5
        %v1820 = vadd.f32 %v1724, 0.5
        %v1821 = vadd.f32 %v1725, 0.5
        %v1822 = vadd.f32 %v1726, 0.5
        %v1823 = vadd.f32 %v1727, 0.5
        %v1824 = vadd.f32 %v1728, 0.5
        %v1825 = vadd.f32 %v1729, 0.5
        %v1826 = vadd.f32 %v1730, 0.5
        %v1827 = vadd.f32 %v1731, 0.5
        %v1828 = vadd.f32 %v1732, 0.5
        %v1829 = vadd.f32 %v1733, 0.5
        %v1830 = vadd.f32 %v1734, 0.5
        %v1831 = vadd.f32 %v1735, 0.5
        %v1832 = vadd.f32 %v1736, 0.5
        %v1833 = vadd.f32 %v1737, 0.5
        %v1834 = vadd.f32 %v1738, 0.5
        %v1835 = vadd.f32 %v1739, 0.5
        %v1836 = vadd.f32 %v1740, 0.5
        %v1837 = vadd.f32 %v1741, 0.5
        %v1838 = vadd.f32 %v1742, 0.5
        %1839 = vst [vmem:[%s272] sm:$0xff] %v1743
        %1840 = vst [vmem:[%s272 + $0x8] sm:$0xff] %v1744
        %1841 = vst [vmem:[%s272 + $0x10] sm:$0xff] %v1745
        %1842 = vst [vmem:[%s272 + $0x18] sm:$0xff] %v1746
        %1843 = vst [vmem:[%s272 + $0x20] sm:$0xff] %v1747
        %1844 = vst [vmem:[%s272 + $0x28] sm:$0xff] %v1748
        %1845 = vst [vmem:[%s272 + $0x30] sm:$0xff] %v1749
        %1846 = vst [vmem:[%s272 + $0x38] sm:$0xff] %v1750
        %1847 = vst [vmem:[%s272 + $0x40] sm:$0xff] %v1751
        %1848 = vst [vmem:[%s272 + $0x48] sm:$0xff] %v1752
        %1849 = vst [vmem:[%s272 + $0x50] sm:$0xff] %v1753
        %1850 = vst [vmem:[%s272 + $0x58] sm:$0xff] %v1754
        %1851 = vst [vmem:[%s272 + $0x60] sm:$0xff] %v1755
        %1852 = vst [vmem:[%s272 + $0x68] sm:$0xff] %v1756
        %1853 = vst [vmem:[%s272 + $0x70] sm:$0xff] %v1757
        %1854 = vst [vmem:[%s272 + $0x78] sm:$0xff] %v1758
        %1855 = vst [vmem:[%s272 + $0x80] sm:$0xff] %v1759
        %1856 = vst [vmem:[%s272 + $0x88] sm:$0xff] %v1760
        %1857 = vst [vmem:[%s272 + $0x90] sm:$0xff] %v1761
        %1858 = vst [vmem:[%s272 + $0x98] sm:$0xff] %v1762
        %1859 = vst [vmem:[%s272 + $0xa0] sm:$0xff] %v1763
        %1860 = vst [vmem:[%s272 + $0xa8] sm:$0xff] %v1764
        %1861 = vst [vmem:[%s272 + $0xb0] sm:$0xff] %v1765
        %1862 = vst [vmem:[%s272 + $0xb8] sm:$0xff] %v1766
        %1863 = vst [vmem:[%s272 + $0xc0] sm:$0xff] %v1767
        %1864 = vst [vmem:[%s272 + $0xc8] sm:$0xff] %v1768
        %1865 = vst [vmem:[%s272 + $0xd0] sm:$0xff] %v1769
        %1866 = vst [vmem:[%s272 + $0xd8] sm:$0xff] %v1770
        %1867 = vst [vmem:[%s272 + $0xe0] sm:$0xff] %v1771
        %1868 = vst [vmem:[%s272 + $0xe8] sm:$0xff] %v1772
        %1869 = vst [vmem:[%s272 + $0xf0] sm:$0xff] %v1773
        %1870 = vst [vmem:[%s272 + $0xf8] sm:$0xff] %v1774
        %1871 = vst [vmem:[%s272 + $0x100] sm:$0xff] %v1775
        %1872 = vst [vmem:[%s272 + $0x108] sm:$0xff] %v1776
        %1873 = vst [vmem:[%s272 + $0x110] sm:$0xff] %v1777
        %1874 = vst [vmem:[%s272 + $0x118] sm:$0xff] %v1778
        %1875 = vst [vmem:[%s272 + $0x120] sm:$0xff] %v1779
        %1876 = vst [vmem:[%s272 + $0x128] sm:$0xff] %v1780
        %1877 = vst [vmem:[%s272 + $0x130] sm:$0xff] %v1781
        %1878 = vst [vmem:[%s272 + $0x138] sm:$0xff] %v1782
        %1879 = vst [vmem:[%s272 + $0x140] sm:$0xff] %v1783
        %1880 = vst [vmem:[%s272 + $0x148] sm:$0xff] %v1784
        %1881 = vst [vmem:[%s272 + $0x150] sm:$0xff] %v1785
        %1882 = vst [vmem:[%s272 + $0x158] sm:$0xff] %v1786
        %1883 = vst [vmem:[%s272 + $0x160] sm:$0xff] %v1787
        %1884 = vst [vmem:[%s272 + $0x168] sm:$0xff] %v1788
        %1885 = vst [vmem:[%s272 + $0x170] sm:$0xff] %v1789
        %1886 = vst [vmem:[%s272 + $0x178] sm:$0xff] %v1790
        %1887 = vst [vmem:[%s272 + $0x180] sm:$0xff] %v1791
        %1888 = vst [vmem:[%s272 + $0x188] sm:$0xff] %v1792
        %1889 = vst [vmem:[%s272 + $0x190] sm:$0xff] %v1793
        %1890 = vst [vmem:[%s272 + $0x198] sm:$0xff] %v1794
        %1891 = vst [vmem:[%s272 + $0x1a0] sm:$0xff] %v1795
        %1892 = vst [vmem:[%s272 + $0x1a8] sm:$0xff] %v1796
        %1893 = vst [vmem:[%s272 + $0x1b0] sm:$0xff] %v1797
        %1894 = vst [vmem:[%s272 + $0x1b8] sm:$0xff] %v1798
        %1895 = vst [vmem:[%s272 + $0x1c0] sm:$0xff] %v1799
        %1896 = vst [vmem:[%s272 + $0x1c8] sm:$0xff] %v1800
        %1897 = vst [vmem:[%s272 + $0x1d0] sm:$0xff] %v1801
        %1898 = vst [vmem:[%s272 + $0x1d8] sm:$0xff] %v1802
        %1899 = vst [vmem:[%s272 + $0x1e0] sm:$0xff] %v1803
        %1900 = vst [vmem:[%s272 + $0x1e8] sm:$0xff] %v1804
        %1901 = vst [vmem:[%s272 + $0x1f0] sm:$0xff] %v1805
        %1902 = vst [vmem:[%s272 + $0x1f8] sm:$0xff] %v1806
        %1903 = vst [vmem:[%s272 + $0x200] sm:$0xff] %v1807
        %1904 = vst [vmem:[%s272 + $0x208] sm:$0xff] %v1808
        %1905 = vst [vmem:[%s272 + $0x210] sm:$0xff] %v1809
        %1906 = vst [vmem:[%s272 + $0x218] sm:$0xff] %v1810
        %1907 = vst [vmem:[%s272 + $0x220] sm:$0xff] %v1811
        %1908 = vst [vmem:[%s272 + $0x228] sm:$0xff] %v1812
        %1909 = vst [vmem:[%s272 + $0x230] sm:$0xff] %v1813
        %1910 = vst [vmem:[%s272 + $0x238] sm:$0xff] %v1814
        %1911 = vst [vmem:[%s272 + $0x240] sm:$0xff] %v1815
        %1912 = vst [vmem:[%s272 + $0x248] sm:$0xff] %v1816
        %1913 = vst [vmem:[%s272 + $0x250] sm:$0xff] %v1817
        %1914 = vst [vmem:[%s272 + $0x258] sm:$0xff] %v1818
        %1915 = vst [vmem:[%s272 + $0x260] sm:$0xff] %v1819
        %1916 = vst [vmem:[%s272 + $0x268] sm:$0xff] %v1820
        %1917 = vst [vmem:[%s272 + $0x270] sm:$0xff] %v1821
        %1918 = vst [vmem:[%s272 + $0x278] sm:$0xff] %v1822
        %1919 = vst [vmem:[%s272 + $0x280] sm:$0xff] %v1823
        %1920 = vst [vmem:[%s272 + $0x288] sm:$0xff] %v1824
        %1921 = vst [vmem:[%s272 + $0x290] sm:$0xff] %v1825
        %1922 = vst [vmem:[%s272 + $0x298] sm:$0xff] %v1826
        %1923 = vst [vmem:[%s272 + $0x2a0] sm:$0xff] %v1827
        %1924 = vst [vmem:[%s272 + $0x2a8] sm:$0xff] %v1828
        %1925 = vst [vmem:[%s272 + $0x2b0] sm:$0xff] %v1829
        %1926 = vst [vmem:[%s272 + $0x2b8] sm:$0xff] %v1830
        %1927 = vst [vmem:[%s272 + $0x2c0] sm:$0xff] %v1831
        %1928 = vst [vmem:[%s272 + $0x2c8] sm:$0xff] %v1832
        %1929 = vst [vmem:[%s272 + $0x2d0] sm:$0xff] %v1833
        %1930 = vst [vmem:[%s272 + $0x2d8] sm:$0xff] %v1834
        %1931 = vst [vmem:[%s272 + $0x2e0] sm:$0xff] %v1835
        %1932 = vst [vmem:[%s272 + $0x2e8] sm:$0xff] %v1836
        %1933 = vst [vmem:[%s272 + $0x2f0] sm:$0xff] %v1837
        %1934 = vst [vmem:[%s272 + $0x2f8] sm:$0xff] %v1838
        %s1935 = sand.u32 %s141, 1
        %s1936 = scalar_lea.sflag [#allocation4], %s1935
        %s1937 = sand.u32 %s141, 1
        %s1938 = smul.addr %s1937, 768
        %s1939 = scalar_lea.vmem [#allocation8], %s1938
        // Predicated region
        $region53: #{tpu_custom_call.1} parent=39 // pred_check
          %p1940 = pneg %p151
        $region54: #{tpu_custom_call.1} parent=39 // pred_check_branch
          %1942 = sbr.rel (%p1940) target = $region56
        $region55: #{tpu_custom_call.1} parent=39 // pred_region
          %s1943 = smul.u32 32, %s23
          %s1945 = ssub.s32 12288, 12288
          %1946 = vsyncadd %s1936, %s1945
          %s1947 = smul.addr %s1943, 3
          %s1948 = smul.addr %s1947, 128
          %s1949 = scalar_lea.hbm %s5, %s1948
          %s1950 = sshll.u32 %s1939, 4
          %s1951 = int_to_ptr.vmem [resolvable:$true] %s1950
          %1956 = dma.vmem_to_hbm [thread:$0]  %s1951, 12288, %s1949, %s1936, 384, 384, 24
        $region56: #{tpu_custom_call.1} parent=39 // pred_fallthru
          _
      $region40: #{tpu_custom_call.1} parent=5 // pred_fallthru
        _
      %p1957 = scmp.le.s32.totalorder 2, %s18
      // Predicated region
      $region57: #{tpu_custom_call.1} parent=5 // pred_check
        %p1958 = pneg %p1957
      $region58: #{tpu_custom_call.1} parent=5 // pred_check_branch
        %1960 = sbr.rel (%p1958) target = $region60
      $region59: #{tpu_custom_call.1} parent=5 // pred_region
        %s1961 = ssub.s32 %s18, 2
        // Predicated region
        $region61: #{tpu_custom_call.1} parent=59 // pred_check
          %p1962 = pneg %p157
        $region62: #{tpu_custom_call.1} parent=59 // pred_check_branch
          %1964 = sbr.rel (%p1962) target = $region64
        $region63: #{tpu_custom_call.1} parent=59 // pred_region
          %s1965 = sand.u32 %s142, 1
          %s1966 = scalar_lea.sflag [#allocation4], %s1965
          %s1967 = sand.u32 %s142, 1
          %s1968 = smul.addr %s1967, 768
          %s1969 = scalar_lea.vmem [#allocation8], %s1968
          %1970 = dma.done %s1966, 12288
        $region64: #{tpu_custom_call.1} parent=59 // pred_fallthru
          _
      $region60: #{tpu_custom_call.1} parent=5 // pred_fallthru
        _
    $region6: #{tpu_custom_call.1} parent=1 // loop_footer
      %s22 = sadd.s32 1, %s18
    $region7: #{tpu_custom_call.1} parent=1 // loop_footer_branch
      %17 = sbr.rel target = $region3
    $region8: #{tpu_custom_call.1} parent=1 // loop_exit
      _
    %1971 = vsyncpa [#allocation3], 1
    %s1972 = scalar_lea.sflag [#allocation3], 1
    %1973 = vsyncpa %s1972, 1
    %1974 = vsyncpa [#allocation6], 1
    %1975 = vsyncpa [#allocation4], 1
    %s1976 = scalar_lea.sflag [#allocation4], 1
    %1977 = vsyncpa %s1976, 1

</llo_original>
